<compile_context>
chip_gen: v7x
topology: tpu7x:2x2x1
jax: 0.10.0
libtpu: 0.0.40
codegen_flags: <defaults>
</compile_context>

<pallas_src>
import functools

import jax
import jax.numpy as jnp
from jax.experimental import pallas as pl
from jax.experimental.pallas import tpu as pltpu

LN_EPS = 1e-5        # PyTorch nn.LayerNorm default
_TB_CAP = 4096       # per-grid-step batch rows cap (keeps I/O VMEM tiny)


def _round_up(x, m):
    return ((x + m - 1) // m) * m


def _cdiv(a, b):
    return -(-a // b)


def _layernorm(x, v_ref, inv_d):
    """LayerNorm over the last axis with lane padding.

    v_ref rows: 0=bias (unused here), 1=gamma, 2=beta, 3=real-lane mask.
    Two-pass (mean, then centered sum of squares): numerically stable and the
    same two cross-lane reductions as the one-pass form.  The mask zeroes the
    padded lanes of (x - mean) so they don't pollute the variance; the divisor
    inv_d is 1/REAL_feature_dim.  gamma/beta are zero in pad lanes, so padded
    lanes come out exactly 0.
    """
    mean = jnp.sum(x, axis=-1, keepdims=True) * inv_d
    xc = (x - mean) * v_ref[3:4, :]
    var = jnp.sum(xc * xc, axis=-1, keepdims=True) * inv_d
    return xc * jax.lax.rsqrt(var + LN_EPS) * v_ref[1:2, :] + v_ref[2:3, :]


def actor_kernel(x_ref, w1_ref, w2_ref, w3_ref, v1_ref, v2_ref, b3_ref,
                 out_ref, *, inv_fc1, inv_fc2):
    x = x_ref[...]

    # fc1 -> LayerNorm -> ReLU
    h = jnp.dot(x, w1_ref[...], preferred_element_type=jnp.float32) + v1_ref[0:1, :]
    h = jnp.maximum(_layernorm(h, v1_ref, inv_fc1), 0.0)

    # fc2 -> LayerNorm -> ReLU
    h = jnp.dot(h, w2_ref[...], preferred_element_type=jnp.float32) + v2_ref[0:1, :]
    h = jnp.maximum(_layernorm(h, v2_ref, inv_fc2), 0.0)

    # mu -> tanh -> abs  (lane-dense; padded output columns are exactly 0)
    y = jnp.dot(h, w3_ref[...], preferred_element_type=jnp.float32) + b3_ref[...]
    out_ref[...] = jnp.abs(jnp.tanh(y))


def prepare_params(raw):
    """One-time packing/padding of raw (PyTorch-layout) params into kernel-ready
    lane-dense tensors.  Runs once at init, NOT per forward call."""
    w1, b1 = raw["w1"], raw["b1"]          # (fc1, in), (fc1,)
    w2, b2 = raw["w2"], raw["b2"]          # (fc2, fc1), (fc2,)
    w3, b3 = raw["w3"], raw["b3"]          # (act, fc2), (act,)
    g1, be1 = raw["g1"], raw["be1"]
    g2, be2 = raw["g2"], raw["be2"]

    fc1, d_in = w1.shape
    fc2 = w2.shape[0]
    act = w3.shape[0]
    fc1p = _round_up(fc1, 128)
    fc2p = _round_up(fc2, 128)
    actp = _round_up(act, 128)

    def row(v, n):                          # (d,) -> zero-padded (1, n)
        return jnp.pad(v.reshape(1, -1), ((0, 0), (0, n - v.shape[-1])))

    def mask_row(d, n):                     # ones in real lanes, zeros in pad
        return (jnp.arange(n, dtype=jnp.float32) < d).astype(jnp.float32).reshape(1, n)

    # Weights pre-transposed (in, out) and zero-padded to x128 lanes.
    w1_t = jnp.pad(w1.T, ((0, 0), (0, fc1p - fc1)))
    w2_t = jnp.pad(w2.T, ((0, fc1p - fc1), (0, fc2p - fc2)))
    w3_t = jnp.pad(w3.T, ((0, fc2p - fc2), (0, actp - act)))

    # Packed per-layer vectors: rows = [bias, gamma, beta, real-lane mask].
    v1 = jnp.concatenate([row(b1, fc1p), row(g1, fc1p), row(be1, fc1p),
                          mask_row(fc1, fc1p)], axis=0)
    v2 = jnp.concatenate([row(b2, fc2p), row(g2, fc2p), row(be2, fc2p),
                          mask_row(fc2, fc2p)], axis=0)
    b3p = row(b3, actp)

    return {
        "w1_t": w1_t, "w2_t": w2_t, "w3_t": w3_t,
        "v1": v1, "v2": v2, "b3": b3p,
        # Static metadata (Python ints; keep actor_forward un-jitted or mark
        # these as static if jitting).
        "input_dim": int(d_in), "fc1_dim": int(fc1),
        "fc2_dim": int(fc2), "action_dim": int(act),
    }


def actor_forward(state, packed, *, tb=None):
    """Fused ActorNN forward. state: (B, D_in) f32. Returns (B, action_dim)."""
    B, d_in = state.shape
    fc1p = packed["w1_t"].shape[1]
    fc2p = packed["w2_t"].shape[1]
    actp = packed["w3_t"].shape[1]
    fc1, fc2, act = packed["fc1_dim"], packed["fc2_dim"], packed["action_dim"]

    # ---- batch tiling -----------------------------------------------------
    # Minimal pad (to x128); keep >= 2 "parallel" steps when the padded batch
    # is >= 256 so both v7x TensorCores are used (harmless on v5e/v6e); cap
    # per-step rows so double-buffered I/O stays well under VMEM everywhere.
    B128 = _round_up(B, 128)
    if tb is None:
        n_steps = 1 if B128 < 256 else max(2, _cdiv(B128, _TB_CAP))
        TB = _round_up(_cdiv(B128, n_steps), 8)
    else:
        TB = min(_round_up(max(tb, 8), 8), B128)
        n_steps = _cdiv(B128, TB)
    Bp = TB * n_steps

    x = state if Bp == B else jnp.pad(state, ((0, Bp - B), (0, 0)))

    flops = 2 * Bp * (d_in * fc1p + fc1p * fc2p + fc2p * actp)
    bytes_accessed = 4 * (Bp * d_in + Bp * actp
                          + d_in * fc1p + fc1p * fc2p + fc2p * actp
                          + 4 * fc1p + 4 * fc2p + actp)

    kernel = functools.partial(actor_kernel,
                               inv_fc1=1.0 / float(fc1),
                               inv_fc2=1.0 / float(fc2))

    out = pl.pallas_call(
        kernel,
        out_shape=jax.ShapeDtypeStruct((Bp, actp), jnp.float32),
        grid=(n_steps,),
        in_specs=[
            pl.BlockSpec((TB, d_in), lambda i: (i, 0)),     # state: tiled on batch
            pl.BlockSpec((d_in, fc1p), lambda i: (0, 0)),   # weights: VMEM-resident
            pl.BlockSpec((fc1p, fc2p), lambda i: (0, 0)),
            pl.BlockSpec((fc2p, actp), lambda i: (0, 0)),
            pl.BlockSpec((4, fc1p), lambda i: (0, 0)),      # [b1, g1, be1, mask1]
            pl.BlockSpec((4, fc2p), lambda i: (0, 0)),      # [b2, g2, be2, mask2]
            pl.BlockSpec((1, actp), lambda i: (0, 0)),      # b3 (lane-padded)
        ],
        out_specs=pl.BlockSpec((TB, actp), lambda i: (i, 0)),
        compiler_params=pltpu.CompilerParams(
            dimension_semantics=("parallel",),              # 2 TCs on v7x
            vmem_limit_bytes=32 * 1024 * 1024,              # safe on v7x (64 MiB)
        ),
        cost_estimate=pl.CostEstimate(
            flops=flops,
            transcendentals=Bp * (actp + 2),
            bytes_accessed=bytes_accessed,
        ),
    )(x, packed["w1_t"], packed["w2_t"], packed["w3_t"],
      packed["v1"], packed["v2"], packed["b3"])

    return out[:B, :act]


def init_params(key, input_dim, fc1_dim, fc2_dim, action_dim):
    """Deterministic init matching the PyTorch module's __init__ quirks:
    f1 = 1/sqrt(fc1.weight.size()[0]) = 1/sqrt(fc1_dim)   (out_features!)
    f2 = 1/sqrt(fc2.weight.size()[0]) = 1/sqrt(fc2_dim)
    f3 = 0.003
    LayerNorm: gamma=1, beta=0.  Returns PyTorch-layout (out, in) weights.
    """
    k = jax.random.split(key, 6)
    f1 = float(fc1_dim) ** -0.5
    f2 = float(fc2_dim) ** -0.5
    f3 = 0.003
    return {
        "w1": jax.random.uniform(k[0], (fc1_dim, input_dim), jnp.float32, -f1, f1),
        "b1": jax.random.uniform(k[1], (fc1_dim,), jnp.float32, -f1, f1),
        "g1": jnp.ones((fc1_dim,), jnp.float32),
        "be1": jnp.zeros((fc1_dim,), jnp.float32),
        "w2": jax.random.uniform(k[2], (fc2_dim, fc1_dim), jnp.float32, -f2, f2),
        "b2": jax.random.uniform(k[3], (fc2_dim,), jnp.float32, -f2, f2),
        "g2": jnp.ones((fc2_dim,), jnp.float32),
        "be2": jnp.zeros((fc2_dim,), jnp.float32),
        "w3": jax.random.uniform(k[4], (action_dim, fc2_dim), jnp.float32, -f3, f3),
        "b3": jax.random.uniform(k[5], (action_dim,), jnp.float32, -f3, f3),
    }


def _layernorm_ref(x, gamma, beta):
    mean = jnp.mean(x, axis=-1, keepdims=True)
    var = jnp.mean(jnp.square(x - mean), axis=-1, keepdims=True)
    return (x - mean) * jax.lax.rsqrt(var + LN_EPS) * gamma + beta


def actor_forward_ref(state, raw):
    """Pure-JAX reference with PyTorch semantics on the raw (unpadded) params."""
    h = state @ raw["w1"].T + raw["b1"]
    h = jnp.maximum(_layernorm_ref(h, raw["g1"], raw["be1"]), 0.0)
    h = h @ raw["w2"].T + raw["b2"]
    h = jnp.maximum(_layernorm_ref(h, raw["g2"], raw["be2"]), 0.0)
    return jnp.abs(jnp.tanh(h @ raw["w3"].T + raw["b3"]))


# TODO(synk): Adam optimizer / checkpoint save+load from the module are training
# and I/O machinery, not part of the forward pass, and are not translated.

if __name__ == "__main__":
    # Small shapes consistent with the module: state (B, input_dim).
    # B=256 exercises the auto-tiling path: 2 parallel grid steps (TB=128)
    # with VMEM-resident weights and a lane-dense (x128) padded output.
    B, INPUT_DIM, FC1, FC2, ACT = 256, 16, 64, 64, 8

    key = jax.random.PRNGKey(0)
    k_params, k_state = jax.random.split(key)
    raw = init_params(k_params, INPUT_DIM, FC1, FC2, ACT)
    packed = prepare_params(raw)                      # one-time packing/padding
    state = jax.random.normal(k_state, (B, INPUT_DIM), jnp.float32)

    out = actor_forward(state, packed)
    out = jax.block_until_ready(out)

    ref = actor_forward_ref(state, raw)
    assert out.shape == (B, ACT)
    assert jnp.allclose(out, ref, atol=1e-5, rtol=1e-4), "mismatch vs reference"
    assert bool(jnp.all(out >= 0.0)) and bool(jnp.all(out <= 1.0))

    # Also exercise a non-multiple-of-128, tiny-batch case (single grid step,
    # minimal zero pad) to cover the other tiling branch.
    state2 = jax.random.normal(jax.random.PRNGKey(1), (5, INPUT_DIM), jnp.float32)
    out2 = jax.block_until_ready(actor_forward(state2, packed))
    ref2 = actor_forward_ref(state2, raw)
    assert out2.shape == (5, ACT)
    assert jnp.allclose(out2, ref2, atol=1e-5, rtol=1e-4), "mismatch (small batch)"

    print("KERNEL_OK")
</pallas_src>

<mosaic_0001>
module attributes {stable_mosaic.version = 11 : i64} {
  func.func @actor_kernel(%arg0: i32, %arg1: memref<128x16xf32, #tpu.memory_space<vmem>>, %arg2: memref<16x128xf32, #tpu.memory_space<vmem>>, %arg3: memref<128x128xf32, #tpu.memory_space<vmem>>, %arg4: memref<128x128xf32, #tpu.memory_space<vmem>>, %arg5: memref<4x128xf32, #tpu.memory_space<vmem>>, %arg6: memref<4x128xf32, #tpu.memory_space<vmem>>, %arg7: memref<1x128xf32, #tpu.memory_space<vmem>>, %arg8: memref<128x128xf32, #tpu.memory_space<vmem>>) attributes {dimension_semantics = [#tpu.dimension_semantics<parallel>], iteration_bounds = array<i64: 2>, scalar_prefetch = 0 : i64, scratch_operands = 0 : i64, tpu.core_type = #tpu.core_type<tc>, window_params = [{transform_indices = @transform_0, window_bounds = array<i64: 128, 16>}, {pipeline_mode = #tpu.pipeline_mode<synchronous>, transform_indices = @transform_1, window_bounds = array<i64: 16, 128>}, {pipeline_mode = #tpu.pipeline_mode<synchronous>, transform_indices = @transform_2, window_bounds = array<i64: 128, 128>}, {pipeline_mode = #tpu.pipeline_mode<synchronous>, transform_indices = @transform_3, window_bounds = array<i64: 128, 128>}, {pipeline_mode = #tpu.pipeline_mode<synchronous>, transform_indices = @transform_4, window_bounds = array<i64: 4, 128>}, {pipeline_mode = #tpu.pipeline_mode<synchronous>, transform_indices = @transform_5, window_bounds = array<i64: 4, 128>}, {pipeline_mode = #tpu.pipeline_mode<synchronous>, transform_indices = @transform_6, window_bounds = array<i64: 1, 128>}, {transform_indices = @transform_7, window_bounds = array<i64: 128, 128>}]} {
    %c0 = arith.constant 0 : index
    %c0_0 = arith.constant 0 : index
    %0 = vector.load %arg1[%c0, %c0_0] : memref<128x16xf32, #tpu.memory_space<vmem>>, vector<128x16xf32>
    %c0_1 = arith.constant 0 : index
    %c0_2 = arith.constant 0 : index
    %1 = vector.load %arg2[%c0_1, %c0_2] : memref<16x128xf32, #tpu.memory_space<vmem>>, vector<16x128xf32>
    %cst = arith.constant dense<0.000000e+00> : vector<128x128xf32>
    %2 = tpu.matmul %0, %1, %cst {dimension_numbers = #tpu.dot_dimension_numbers<[1], [0], [0], [1], [0, 0, 1, 1], [], []>} : vector<128x16xf32>, vector<16x128xf32>, vector<128x128xf32> -> vector<128x128xf32>
    %c0_3 = arith.constant 0 : index
    %c0_4 = arith.constant 0 : index
    %3 = vector.load %arg5[%c0_3, %c0_4] : memref<4x128xf32, #tpu.memory_space<vmem>>, vector<1x128xf32>
    %4 = vector.broadcast %3 : vector<1x128xf32> to vector<128x128xf32>
    %5 = arith.addf %2, %4 : vector<128x128xf32>
    %cst_5 = arith.constant dense<0.000000e+00> : vector<128xf32>
    %6 = vector.multi_reduction <add>, %5, %cst_5 [1] : vector<128x128xf32> to vector<128xf32>
    %7 = vector.shape_cast %6 : vector<128xf32> to vector<128x1xf32>
    %cst_6 = arith.constant 1.562500e-02 : f32
    %8 = vector.broadcast %cst_6 : f32 to vector<128x1xf32>
    %9 = arith.mulf %7, %8 : vector<128x1xf32>
    %10 = vector.broadcast %9 : vector<128x1xf32> to vector<128x128xf32>
    %11 = arith.subf %5, %10 : vector<128x128xf32>
    %c3 = arith.constant 3 : index
    %c0_7 = arith.constant 0 : index
    %12 = vector.load %arg5[%c3, %c0_7] : memref<4x128xf32, #tpu.memory_space<vmem>>, vector<1x128xf32>
    %13 = vector.broadcast %12 : vector<1x128xf32> to vector<128x128xf32>
    %14 = arith.mulf %11, %13 : vector<128x128xf32>
    %15 = arith.mulf %14, %14 : vector<128x128xf32>
    %cst_8 = arith.constant dense<0.000000e+00> : vector<128xf32>
    %16 = vector.multi_reduction <add>, %15, %cst_8 [1] : vector<128x128xf32> to vector<128xf32>
    %17 = vector.shape_cast %16 : vector<128xf32> to vector<128x1xf32>
    %cst_9 = arith.constant 1.562500e-02 : f32
    %18 = vector.broadcast %cst_9 : f32 to vector<128x1xf32>
    %19 = arith.mulf %17, %18 : vector<128x1xf32>
    %cst_10 = arith.constant 9.99999974E-6 : f32
    %20 = vector.broadcast %cst_10 : f32 to vector<128x1xf32>
    %21 = arith.addf %19, %20 : vector<128x1xf32>
    %22 = math.rsqrt %21 : vector<128x1xf32>
    %23 = vector.broadcast %22 : vector<128x1xf32> to vector<128x128xf32>
    %24 = arith.mulf %14, %23 : vector<128x128xf32>
    %c1 = arith.constant 1 : index
    %c0_11 = arith.constant 0 : index
    %25 = vector.load %arg5[%c1, %c0_11] : memref<4x128xf32, #tpu.memory_space<vmem>>, vector<1x128xf32>
    %26 = vector.broadcast %25 : vector<1x128xf32> to vector<128x128xf32>
    %27 = arith.mulf %24, %26 : vector<128x128xf32>
    %c2 = arith.constant 2 : index
    %c0_12 = arith.constant 0 : index
    %28 = vector.load %arg5[%c2, %c0_12] : memref<4x128xf32, #tpu.memory_space<vmem>>, vector<1x128xf32>
    %29 = vector.broadcast %28 : vector<1x128xf32> to vector<128x128xf32>
    %30 = arith.addf %27, %29 : vector<128x128xf32>
    %cst_13 = arith.constant 0.000000e+00 : f32
    %31 = vector.broadcast %cst_13 : f32 to vector<128x128xf32>
    %32 = arith.maximumf %30, %31 : vector<128x128xf32>
    %c0_14 = arith.constant 0 : index
    %c0_15 = arith.constant 0 : index
    %33 = vector.load %arg3[%c0_14, %c0_15] : memref<128x128xf32, #tpu.memory_space<vmem>>, vector<128x128xf32>
    %cst_16 = arith.constant dense<0.000000e+00> : vector<128x128xf32>
    %34 = tpu.matmul %32, %33, %cst_16 {dimension_numbers = #tpu.dot_dimension_numbers<[1], [0], [0], [1], [0, 0, 1, 1], [], []>} : vector<128x128xf32>, vector<128x128xf32>, vector<128x128xf32> -> vector<128x128xf32>
    %c0_17 = arith.constant 0 : index
    %c0_18 = arith.constant 0 : index
    %35 = vector.load %arg6[%c0_17, %c0_18] : memref<4x128xf32, #tpu.memory_space<vmem>>, vector<1x128xf32>
    %36 = vector.broadcast %35 : vector<1x128xf32> to vector<128x128xf32>
    %37 = arith.addf %34, %36 : vector<128x128xf32>
    %cst_19 = arith.constant dense<0.000000e+00> : vector<128xf32>
    %38 = vector.multi_reduction <add>, %37, %cst_19 [1] : vector<128x128xf32> to vector<128xf32>
    %39 = vector.shape_cast %38 : vector<128xf32> to vector<128x1xf32>
    %cst_20 = arith.constant 1.562500e-02 : f32
    %40 = vector.broadcast %cst_20 : f32 to vector<128x1xf32>
    %41 = arith.mulf %39, %40 : vector<128x1xf32>
    %42 = vector.broadcast %41 : vector<128x1xf32> to vector<128x128xf32>
    %43 = arith.subf %37, %42 : vector<128x128xf32>
    %c3_21 = arith.constant 3 : index
    %c0_22 = arith.constant 0 : index
    %44 = vector.load %arg6[%c3_21, %c0_22] : memref<4x128xf32, #tpu.memory_space<vmem>>, vector<1x128xf32>
    %45 = vector.broadcast %44 : vector<1x128xf32> to vector<128x128xf32>
    %46 = arith.mulf %43, %45 : vector<128x128xf32>
    %47 = arith.mulf %46, %46 : vector<128x128xf32>
    %cst_23 = arith.constant dense<0.000000e+00> : vector<128xf32>
    %48 = vector.multi_reduction <add>, %47, %cst_23 [1] : vector<128x128xf32> to vector<128xf32>
    %49 = vector.shape_cast %48 : vector<128xf32> to vector<128x1xf32>
    %cst_24 = arith.constant 1.562500e-02 : f32
    %50 = vector.broadcast %cst_24 : f32 to vector<128x1xf32>
    %51 = arith.mulf %49, %50 : vector<128x1xf32>
    %cst_25 = arith.constant 9.99999974E-6 : f32
    %52 = vector.broadcast %cst_25 : f32 to vector<128x1xf32>
    %53 = arith.addf %51, %52 : vector<128x1xf32>
    %54 = math.rsqrt %53 : vector<128x1xf32>
    %55 = vector.broadcast %54 : vector<128x1xf32> to vector<128x128xf32>
    %56 = arith.mulf %46, %55 : vector<128x128xf32>
    %c1_26 = arith.constant 1 : index
    %c0_27 = arith.constant 0 : index
    %57 = vector.load %arg6[%c1_26, %c0_27] : memref<4x128xf32, #tpu.memory_space<vmem>>, vector<1x128xf32>
    %58 = vector.broadcast %57 : vector<1x128xf32> to vector<128x128xf32>
    %59 = arith.mulf %56, %58 : vector<128x128xf32>
    %c2_28 = arith.constant 2 : index
    %c0_29 = arith.constant 0 : index
    %60 = vector.load %arg6[%c2_28, %c0_29] : memref<4x128xf32, #tpu.memory_space<vmem>>, vector<1x128xf32>
    %61 = vector.broadcast %60 : vector<1x128xf32> to vector<128x128xf32>
    %62 = arith.addf %59, %61 : vector<128x128xf32>
    %cst_30 = arith.constant 0.000000e+00 : f32
    %63 = vector.broadcast %cst_30 : f32 to vector<128x128xf32>
    %64 = arith.maximumf %62, %63 : vector<128x128xf32>
    %c0_31 = arith.constant 0 : index
    %c0_32 = arith.constant 0 : index
    %65 = vector.load %arg4[%c0_31, %c0_32] : memref<128x128xf32, #tpu.memory_space<vmem>>, vector<128x128xf32>
    %cst_33 = arith.constant dense<0.000000e+00> : vector<128x128xf32>
    %66 = tpu.matmul %64, %65, %cst_33 {dimension_numbers = #tpu.dot_dimension_numbers<[1], [0], [0], [1], [0, 0, 1, 1], [], []>} : vector<128x128xf32>, vector<128x128xf32>, vector<128x128xf32> -> vector<128x128xf32>
    %c0_34 = arith.constant 0 : index
    %c0_35 = arith.constant 0 : index
    %67 = vector.load %arg7[%c0_34, %c0_35] : memref<1x128xf32, #tpu.memory_space<vmem>>, vector<1x128xf32>
    %68 = vector.broadcast %67 : vector<1x128xf32> to vector<128x128xf32>
    %69 = arith.addf %66, %68 : vector<128x128xf32>
    %70 = math.tanh %69 : vector<128x128xf32>
    %71 = math.absf %70 : vector<128x128xf32>
    %c0_36 = arith.constant 0 : index
    %c0_37 = arith.constant 0 : index
    %72 = vector.load %arg8[%c0_36, %c0_37] : memref<128x128xf32, #tpu.memory_space<vmem>>, vector<128x128xf32>
    tpu.vector_store %arg8[%c0_36, %c0_37], %71 {strides = array<i32>} : memref<128x128xf32, #tpu.memory_space<vmem>>, vector<128x128xf32>,
    return
  }
  func.func @transform_0(%arg0: i32) -> (i32, i32) {
    %c0_i32 = arith.constant 0 : i32
    %c0_i32_0 = arith.constant 0 : i32
    return %arg0, %c0_i32 : i32, i32
  }
  func.func @transform_1(%arg0: i32) -> (i32, i32) {
    %c0_i32 = arith.constant 0 : i32
    %c0_i32_0 = arith.constant 0 : i32
    %c0_i32_1 = arith.constant 0 : i32
    return %c0_i32, %c0_i32_0 : i32, i32
  }
  func.func @transform_2(%arg0: i32) -> (i32, i32) {
    %c0_i32 = arith.constant 0 : i32
    %c0_i32_0 = arith.constant 0 : i32
    %c0_i32_1 = arith.constant 0 : i32
    return %c0_i32, %c0_i32_0 : i32, i32
  }
  func.func @transform_3(%arg0: i32) -> (i32, i32) {
    %c0_i32 = arith.constant 0 : i32
    %c0_i32_0 = arith.constant 0 : i32
    %c0_i32_1 = arith.constant 0 : i32
    return %c0_i32, %c0_i32_0 : i32, i32
  }
  func.func @transform_4(%arg0: i32) -> (i32, i32) {
    %c0_i32 = arith.constant 0 : i32
    %c0_i32_0 = arith.constant 0 : i32
    %c0_i32_1 = arith.constant 0 : i32
    return %c0_i32, %c0_i32_0 : i32, i32
  }
  func.func @transform_5(%arg0: i32) -> (i32, i32) {
    %c0_i32 = arith.constant 0 : i32
    %c0_i32_0 = arith.constant 0 : i32
    %c0_i32_1 = arith.constant 0 : i32
    return %c0_i32, %c0_i32_0 : i32, i32
  }
  func.func @transform_6(%arg0: i32) -> (i32, i32) {
    %c0_i32 = arith.constant 0 : i32
    %c0_i32_0 = arith.constant 0 : i32
    %c0_i32_1 = arith.constant 0 : i32
    return %c0_i32, %c0_i32_0 : i32, i32
  }
  func.func @transform_7(%arg0: i32) -> (i32, i32) {
    %c0_i32 = arith.constant 0 : i32
    %c0_i32_0 = arith.constant 0 : i32
    return %arg0, %c0_i32 : i32, i32
  }
}

</mosaic_0001>

<llo_original>
// kernel: tpu_custom_call.1
$region0: #{tpu_custom_call.1}
  #allocation0 [shape = 'u32[]', space=smem, size = 0x4, offset = 0x4, fixed_abs, tag = 'smem constant byte address 0x4 - core index']
  #allocation1 [shape = 'u32[144,128]{1,0:T(1,128)}', space=vmem, size = 0x12000, scoped, tag = 'internal scratch']
  %s0 = inlined_call_operand.vmem [shape: f32[256,16], index: 0, kind: input, shape index: {}]
  %s1 = inlined_call_operand.vmem [shape: f32[16,128], index: 1, kind: input, shape index: {}]
  %s2 = inlined_call_operand.vmem [shape: f32[128,128], index: 2, kind: input, shape index: {}]
  %s3 = inlined_call_operand.vmem [shape: f32[128,128], index: 3, kind: input, shape index: {}]
  %s4 = inlined_call_operand.vmem [shape: f32[4,128], index: 4, kind: input, shape index: {}]
  %s5 = inlined_call_operand.vmem [shape: f32[4,128], index: 5, kind: input, shape index: {}]
  %s6 = inlined_call_operand.vmem [shape: f32[1,128], index: 6, kind: input, shape index: {}]
  %s7 = inlined_call_operand.hbm [shape: f32[256,128], index: 7, kind: output, shape index: {}]
  %s8 = sld [smem:[#allocation0]]
  $region61: #{tpu_custom_call.1} parent=0
    _
  %s10 = ssub.s32 1, %s8
  %s11 = scalar_select 0, %s10, %s8
  $region1: #{tpu_custom_call.1} parent=0
    #allocation2 [shape = 'u8[131072]{0}', space=vmem, size = 0x20000, scoped, tag = 'output window, operand 0']
    #allocation3 [shape = 's32[2]{0}', space=sflag, size = 0x8, scoped, tag = 'scoped memory for tpu_custom_call.1']
    %12 = vsyncpa [#allocation3], 0
    %s13 = scalar_lea.sflag [#allocation3], 1
    %14 = vsyncpa %s13, 0
    loop: start=0, step=1, limit=4
    $region2: #{tpu_custom_call.1} parent=1 // loop_pre_header
      _
    $region3: #{tpu_custom_call.1} parent=1 // loop_header
      %s16 = sphi 0, %s20
      %p17 = scmp.ge.s32.totalorder %s16, 4
      %s26 = sphi 0, %s28
      %s29 = sphi 0, %s26
      %s30 = sphi 0, %s29
      %s46 = sphi 0, %s30
      %s50 = sphi 0, %s50
      %s52 = sphi 0, %s50
      %s53 = sphi 0, %s52
      %s67 = sphi 0, %s53
      %s71 = sphi 0, %s71
      %s73 = sphi 0, %s71
      %s74 = sphi 0, %s73
      %s88 = sphi 0, %s74
      %s92 = sphi 0, %s92
      %s94 = sphi 0, %s92
      %s95 = sphi 0, %s94
      %s109 = sphi 0, %s95
      %s113 = sphi 0, %s113
      %s115 = sphi 0, %s113
      %s116 = sphi 0, %s115
      %s130 = sphi 0, %s116
      %s134 = sphi 0, %s134
      %s136 = sphi 0, %s134
      %s137 = sphi 0, %s136
      %s151 = sphi 0, %s137
      %s155 = sphi 0, %s155
      %s157 = sphi 0, %s155
      %s158 = sphi 0, %s157
      %s172 = sphi 0, %s158
      %s178 = sphi 0, %s180
      %s181 = sphi 0, %s178
      %s182 = sphi 0, %s181
      %s198 = sphi 0, %s182
    $region4: #{tpu_custom_call.1} parent=1 // loop_header_branch
      %19 = sbr.rel (%p17) target = $region8
    $region5: #{tpu_custom_call.1} parent=1 // loop_body
      %s21 = ssub.s32 %s16, 1
      %s22 = ssub.s32 %s16, 2
      %s23 = sadd.s32 %s16, 1
      %s24 = ssub.s32 %s16, %s23
      %p25 = scmp.eq.s32.totalorder %s24, 0
      %s27 = sadd.s32 %s26, 1
      %s28 = scalar_select %p25, %s26, %s27
      %p31 = pneg %p25
      %p32 = scmp.eq.s32.totalorder %s16, 1
      %p33 = por %p31, %p32
      %p34 = scmp.ne.s32.totalorder %s26, %s29
      %p35 = scmp.eq.s32.totalorder %s16, 0
      %p36 = por %p34, %p35
      %p37 = scmp.ne.s32.totalorder %s26, %s29
      %p38 = scmp.eq.s32.totalorder %s21, 1
      %p39 = por %p37, %p38
      %p40 = scmp.ne.s32.totalorder %s29, %s30
      %p41 = scmp.eq.s32.totalorder %s21, 0
      %p42 = por %p40, %p41
      %p43 = scmp.ne.s32.totalorder %s29, %s30
      %p44 = scmp.eq.s32.totalorder %s22, 1
      %p45 = por %p43, %p44
      %p47 = scmp.ne.s32.totalorder %s30, %s46
      %p48 = scmp.eq.s32.totalorder %s22, 0
      %p49 = por %p47, %p48
      %s51 = sadd.s32 %s50, 1
      %p54 = scmp.eq.s32.totalorder %s16, 1
      %p55 = scmp.ne.s32.totalorder %s50, %s52
      %p56 = scmp.eq.s32.totalorder %s16, 0
      %p57 = por %p55, %p56
      %p58 = scmp.ne.s32.totalorder %s50, %s52
      %p59 = scmp.eq.s32.totalorder %s21, 1
      %p60 = por %p58, %p59
      %p61 = scmp.ne.s32.totalorder %s52, %s53
      %p62 = scmp.eq.s32.totalorder %s21, 0
      %p63 = por %p61, %p62
      %p64 = scmp.ne.s32.totalorder %s52, %s53
      %p65 = scmp.eq.s32.totalorder %s22, 1
      %p66 = por %p64, %p65
      %p68 = scmp.ne.s32.totalorder %s53, %s67
      %p69 = scmp.eq.s32.totalorder %s22, 0
      %p70 = por %p68, %p69
      %s72 = sadd.s32 %s71, 1
      %p75 = scmp.eq.s32.totalorder %s16, 1
      %p76 = scmp.ne.s32.totalorder %s71, %s73
      %p77 = scmp.eq.s32.totalorder %s16, 0
      %p78 = por %p76, %p77
      %p79 = scmp.ne.s32.totalorder %s71, %s73
      %p80 = scmp.eq.s32.totalorder %s21, 1
      %p81 = por %p79, %p80
      %p82 = scmp.ne.s32.totalorder %s73, %s74
      %p83 = scmp.eq.s32.totalorder %s21, 0
      %p84 = por %p82, %p83
      %p85 = scmp.ne.s32.totalorder %s73, %s74
      %p86 = scmp.eq.s32.totalorder %s22, 1
      %p87 = por %p85, %p86
      %p89 = scmp.ne.s32.totalorder %s74, %s88
      %p90 = scmp.eq.s32.totalorder %s22, 0
      %p91 = por %p89, %p90
      %s93 = sadd.s32 %s92, 1
      %p96 = scmp.eq.s32.totalorder %s16, 1
      %p97 = scmp.ne.s32.totalorder %s92, %s94
      %p98 = scmp.eq.s32.totalorder %s16, 0
      %p99 = por %p97, %p98
      %p100 = scmp.ne.s32.totalorder %s92, %s94
      %p101 = scmp.eq.s32.totalorder %s21, 1
      %p102 = por %p100, %p101
      %p103 = scmp.ne.s32.totalorder %s94, %s95
      %p104 = scmp.eq.s32.totalorder %s21, 0
      %p105 = por %p103, %p104
      %p106 = scmp.ne.s32.totalorder %s94, %s95
      %p107 = scmp.eq.s32.totalorder %s22, 1
      %p108 = por %p106, %p107
      %p110 = scmp.ne.s32.totalorder %s95, %s109
      %p111 = scmp.eq.s32.totalorder %s22, 0
      %p112 = por %p110, %p111
      %s114 = sadd.s32 %s113, 1
      %p117 = scmp.eq.s32.totalorder %s16, 1
      %p118 = scmp.ne.s32.totalorder %s113, %s115
      %p119 = scmp.eq.s32.totalorder %s16, 0
      %p120 = por %p118, %p119
      %p121 = scmp.ne.s32.totalorder %s113, %s115
      %p122 = scmp.eq.s32.totalorder %s21, 1
      %p123 = por %p121, %p122
      %p124 = scmp.ne.s32.totalorder %s115, %s116
      %p125 = scmp.eq.s32.totalorder %s21, 0
      %p126 = por %p124, %p125
      %p127 = scmp.ne.s32.totalorder %s115, %s116
      %p128 = scmp.eq.s32.totalorder %s22, 1
      %p129 = por %p127, %p128
      %p131 = scmp.ne.s32.totalorder %s116, %s130
      %p132 = scmp.eq.s32.totalorder %s22, 0
      %p133 = por %p131, %p132
      %s135 = sadd.s32 %s134, 1
      %p138 = scmp.eq.s32.totalorder %s16, 1
      %p139 = scmp.ne.s32.totalorder %s134, %s136
      %p140 = scmp.eq.s32.totalorder %s16, 0
      %p141 = por %p139, %p140
      %p142 = scmp.ne.s32.totalorder %s134, %s136
      %p143 = scmp.eq.s32.totalorder %s21, 1
      %p144 = por %p142, %p143
      %p145 = scmp.ne.s32.totalorder %s136, %s137
      %p146 = scmp.eq.s32.totalorder %s21, 0
      %p147 = por %p145, %p146
      %p148 = scmp.ne.s32.totalorder %s136, %s137
      %p149 = scmp.eq.s32.totalorder %s22, 1
      %p150 = por %p148, %p149
      %p152 = scmp.ne.s32.totalorder %s137, %s151
      %p153 = scmp.eq.s32.totalorder %s22, 0
      %p154 = por %p152, %p153
      %s156 = sadd.s32 %s155, 1
      %p159 = scmp.eq.s32.totalorder %s16, 1
      %p160 = scmp.ne.s32.totalorder %s155, %s157
      %p161 = scmp.eq.s32.totalorder %s16, 0
      %p162 = por %p160, %p161
      %p163 = scmp.ne.s32.totalorder %s155, %s157
      %p164 = scmp.eq.s32.totalorder %s21, 1
      %p165 = por %p163, %p164
      %p166 = scmp.ne.s32.totalorder %s157, %s158
      %p167 = scmp.eq.s32.totalorder %s21, 0
      %p168 = por %p166, %p167
      %p169 = scmp.ne.s32.totalorder %s157, %s158
      %p170 = scmp.eq.s32.totalorder %s22, 1
      %p171 = por %p169, %p170
      %p173 = scmp.ne.s32.totalorder %s158, %s172
      %p174 = scmp.eq.s32.totalorder %s22, 0
      %p175 = por %p173, %p174
      %s176 = ssub.s32 %s16, %s23
      %p177 = scmp.eq.s32.totalorder %s176, 0
      %s179 = sadd.s32 %s178, 1
      %s180 = scalar_select %p177, %s178, %s179
      %p183 = pneg %p177
      %p184 = scmp.eq.s32.totalorder %s16, 1
      %p185 = por %p183, %p184
      %p186 = scmp.ne.s32.totalorder %s178, %s181
      %p187 = scmp.eq.s32.totalorder %s16, 0
      %p188 = por %p186, %p187
      %p189 = scmp.ne.s32.totalorder %s178, %s181
      %p190 = scmp.eq.s32.totalorder %s21, 1
      %p191 = por %p189, %p190
      %p192 = scmp.ne.s32.totalorder %s181, %s182
      %p193 = scmp.eq.s32.totalorder %s21, 0
      %p194 = por %p192, %p193
      %p195 = scmp.ne.s32.totalorder %s181, %s182
      %p196 = scmp.eq.s32.totalorder %s22, 1
      %p197 = por %p195, %p196
      %p199 = scmp.ne.s32.totalorder %s182, %s198
      %p200 = scmp.eq.s32.totalorder %s22, 0
      %p201 = por %p199, %p200
      %p202 = scmp.le.s32.totalorder 1, %s16
      %p203 = scmp.lt.s32.totalorder %s16, 3
      %p204 = pnand %p202, %p203
      %p205 = pneg %p204
      // Predicated region
      $region9: #{tpu_custom_call.1} parent=5 // pred_check
        _
      $region10: #{tpu_custom_call.1} parent=5 // pred_check_branch
        %207 = sbr.rel (%p204) target = $region12
      $region11: #{tpu_custom_call.1} parent=5 // pred_region
        %s208 = ssub.s32 %s16, 1
        // Predicated region
        $region13: #{tpu_custom_call.1} parent=11 // pred_check
          %p209 = pneg %p63
        $region14: #{tpu_custom_call.1} parent=11 // pred_check_branch
          %211 = sbr.rel (%p209) target = $region16
        $region15: #{tpu_custom_call.1} parent=11 // pred_region
          _
        $region16: #{tpu_custom_call.1} parent=11 // pred_fallthru
          _
        // Predicated region
        $region17: #{tpu_custom_call.1} parent=11 // pred_check
          %p212 = pneg %p84
        $region18: #{tpu_custom_call.1} parent=11 // pred_check_branch
          %214 = sbr.rel (%p212) target = $region20
        $region19: #{tpu_custom_call.1} parent=11 // pred_region
          _
        $region20: #{tpu_custom_call.1} parent=11 // pred_fallthru
          _
        // Predicated region
        $region21: #{tpu_custom_call.1} parent=11 // pred_check
          %p215 = pneg %p105
        $region22: #{tpu_custom_call.1} parent=11 // pred_check_branch
          %217 = sbr.rel (%p215) target = $region24
        $region23: #{tpu_custom_call.1} parent=11 // pred_region
          _
        $region24: #{tpu_custom_call.1} parent=11 // pred_fallthru
          _
        // Predicated region
        $region25: #{tpu_custom_call.1} parent=11 // pred_check
          %p218 = pneg %p126
        $region26: #{tpu_custom_call.1} parent=11 // pred_check_branch
          %220 = sbr.rel (%p218) target = $region28
        $region27: #{tpu_custom_call.1} parent=11 // pred_region
          _
        $region28: #{tpu_custom_call.1} parent=11 // pred_fallthru
          _
        // Predicated region
        $region29: #{tpu_custom_call.1} parent=11 // pred_check
          %p221 = pneg %p147
        $region30: #{tpu_custom_call.1} parent=11 // pred_check_branch
          %223 = sbr.rel (%p221) target = $region32
        $region31: #{tpu_custom_call.1} parent=11 // pred_region
          _
        $region32: #{tpu_custom_call.1} parent=11 // pred_fallthru
          _
        // Predicated region
        $region33: #{tpu_custom_call.1} parent=11 // pred_check
          %p224 = pneg %p168
        $region34: #{tpu_custom_call.1} parent=11 // pred_check_branch
          %226 = sbr.rel (%p224) target = $region36
        $region35: #{tpu_custom_call.1} parent=11 // pred_region
          _
        $region36: #{tpu_custom_call.1} parent=11 // pred_fallthru
          _
      $region12: #{tpu_custom_call.1} parent=5 // pred_fallthru
        _
      %p227 = scmp.lt.s32.totalorder %s16, 2
      // Predicated region
      $region37: #{tpu_custom_call.1} parent=5 // pred_check
        %p228 = pneg %p227
      $region38: #{tpu_custom_call.1} parent=5 // pred_check_branch
        %230 = sbr.rel (%p228) target = $region40
      $region39: #{tpu_custom_call.1} parent=5 // pred_region
        // Predicated region
        $region41: #{tpu_custom_call.1} parent=39 // pred_check
          %p231 = pneg %p36
        $region42: #{tpu_custom_call.1} parent=39 // pred_check_branch
          %233 = sbr.rel (%p231) target = $region44
        $region43: #{tpu_custom_call.1} parent=39 // pred_region
          %s234 = smul.u32 16, %s16
          %p235 = scmp.lt.s32.totalorder %s234, 31
          %s236 = scalar_select %p235, %s234, 31
          %s237 = smul.addr %s236, 8
          %s238 = scalar_lea.vmem %s0, %s237
          %s239 = smul.u32 16, %s16
        $region44: #{tpu_custom_call.1} parent=39 // pred_fallthru
          _
      $region40: #{tpu_custom_call.1} parent=5 // pred_fallthru
        _
      %p240 = scmp.le.s32.totalorder 1, %s16
      %p241 = scmp.lt.s32.totalorder %s16, 3
      %p242 = pnand %p240, %p241
      %p243 = pneg %p242
      // Predicated region
      $region45: #{tpu_custom_call.1} parent=5 // pred_check
        _
      $region46: #{tpu_custom_call.1} parent=5 // pred_check_branch
        %245 = sbr.rel (%p242) target = $region48
      $region47: #{tpu_custom_call.1} parent=5 // pred_region
        %s246 = ssub.s32 %s16, 1
        %s247 = smul.u32 16, %s21
        %p248 = scmp.lt.s32.totalorder %s247, 31
        %s249 = scalar_select %p248, %s247, 31
        %s250 = smul.addr %s249, 8
        %s251 = scalar_lea.vmem %s0, %s250
        %p252 = pneg %p42
        %p253 = pneg %p39
        %p254 = pneg %p63
        %p255 = pneg %p60
        %p256 = pneg %p84
        %p257 = pneg %p81
        %p258 = pneg %p105
        %p259 = pneg %p102
        %p260 = pneg %p126
        %p261 = pneg %p123
        %p262 = pneg %p147
        %p263 = pneg %p144
        %p264 = pneg %p168
        %p265 = pneg %p165
        %p266 = pneg %p194
        %p267 = pneg %p191
        %s268 = sand.u32 %s181, 1
        %s269 = scalar_lea.sflag [#allocation3], %s268
        %s270 = sand.u32 %s181, 1
        %s271 = smul.addr %s270, 128
        %s272 = scalar_lea.vmem [#allocation2], %s271
        %s273 = smul.u32 16, %s21
        %p274 = scmp.lt.s32.totalorder %s273, 31
        %s275 = scalar_select %p274, %s273, 31
        %s276 = smul.addr %s275, 8
        %s277 = scalar_lea.vmem %s0, %s276
        %s278 = smul.u32 16, %s21
        %s279 = smul.u32 16, %s21
        %v280 = vld [vmem:[%s277] sm:$0xff]
        %v281 = vld [vmem:[%s277 + $0x8] sm:$0xff]
        %v282 = vld [vmem:[%s277 + $0x10] sm:$0xff]
        %v283 = vld [vmem:[%s277 + $0x18] sm:$0xff]
        %v284 = vld [vmem:[%s277 + $0x20] sm:$0xff]
        %v285 = vld [vmem:[%s277 + $0x28] sm:$0xff]
        %v286 = vld [vmem:[%s277 + $0x30] sm:$0xff]
        %v287 = vld [vmem:[%s277 + $0x38] sm:$0xff]
        %v288 = vld [vmem:[%s277 + $0x40] sm:$0xff]
        %v289 = vld [vmem:[%s277 + $0x48] sm:$0xff]
        %v290 = vld [vmem:[%s277 + $0x50] sm:$0xff]
        %v291 = vld [vmem:[%s277 + $0x58] sm:$0xff]
        %v292 = vld [vmem:[%s277 + $0x60] sm:$0xff]
        %v293 = vld [vmem:[%s277 + $0x68] sm:$0xff]
        %v294 = vld [vmem:[%s277 + $0x70] sm:$0xff]
        %v295 = vld [vmem:[%s277 + $0x78] sm:$0xff]
        %v296 = vld [vmem:[%s1] sm:$0xff]
        %v297 = vld [vmem:[%s1 + $0x8] sm:$0xff]
        %v298 = vld [vmem:[%s4] sm:$0x1]
        %v299 = vlaneseq
        %v300 = vshrl.u32 %v299, 7
        %v301 = vsub.s32 0, %v300
        %v302 = vrot.slane %v298, %v301
        %vm303 = vcmask 130048
        %v305 = vsel %vm303, %v280, 0
        %v308 = vsel %vm303, %v281, 0
        %v311 = vsel %vm303, %v282, 0
        %v314 = vsel %vm303, %v283, 0
        %v317 = vsel %vm303, %v284, 0
        %v320 = vsel %vm303, %v285, 0
        %v323 = vsel %vm303, %v286, 0
        %v326 = vsel %vm303, %v287, 0
        %v329 = vsel %vm303, %v288, 0
        %v332 = vsel %vm303, %v289, 0
        %v335 = vsel %vm303, %v290, 0
        %v338 = vsel %vm303, %v291, 0
        %v341 = vsel %vm303, %v292, 0
        %v344 = vsel %vm303, %v293, 0
        %v347 = vsel %vm303, %v294, 0
        %v350 = vsel %vm303, %v295, 0
        %352 = vmatprep.subr.mxu0 0.0
        %353 = vmatpush1.msra.mxu0 %v296
        %354 = vmatprep.subr.mxu0 0.0
        %355 = vmatpush1.msra.mxu0 %v297
        %356 = vmatprep.subr.mxu0 0.0
        %357 = vmatpush1.msra.mxu0 0.0
        %358 = vmatprep.subr.mxu0 0.0
        %359 = vmatpush1.msra.mxu0 0.0
        %360 = vmatprep.subr.mxu0 0.0
        %361 = vmatpush1.msra.mxu0 0.0
        %362 = vmatprep.subr.mxu0 0.0
        %363 = vmatpush1.msra.mxu0 0.0
        %364 = vmatprep.subr.mxu0 0.0
        %365 = vmatpush1.msra.mxu0 0.0
        %366 = vmatprep.subr.mxu0 0.0
        %367 = vmatpush1.msra.mxu0 0.0
        %368 = vmatprep.subr.mxu0 0.0
        %369 = vmatpush1.msra.mxu0 0.0
        %370 = vmatprep.subr.mxu0 0.0
        %371 = vmatpush1.msra.mxu0 0.0
        %372 = vmatprep.subr.mxu0 0.0
        %373 = vmatpush1.msra.mxu0 0.0
        %374 = vmatprep.subr.mxu0 0.0
        %375 = vmatpush1.msra.mxu0 0.0
        %376 = vmatprep.subr.mxu0 0.0
        %377 = vmatpush1.msra.mxu0 0.0
        %378 = vmatprep.subr.mxu0 0.0
        %379 = vmatpush1.msra.mxu0 0.0
        %380 = vmatprep.subr.mxu0 0.0
        %381 = vmatpush1.msra.mxu0 0.0
        %382 = vmatprep.subr.mxu0 0.0
        %383 = vmatpush1.msra.mxu0 0.0
        %384 = vmatprep.subr.mxu0 0.0
        %385 = vmatpush1.msra.mxu0 0.0
        %386 = vmatprep.subr.mxu0 0.0
        %387 = vmatpush1.msra.mxu0 0.0
        %388 = vmatprep.subr.mxu0 0.0
        %389 = vmatpush1.msra.mxu0 0.0
        %390 = vmatprep.subr.mxu0 0.0
        %391 = vmatpush1.msra.mxu0 0.0
        %392 = vmatprep.subr.mxu0 0.0
        %393 = vmatpush1.msra.mxu0 0.0
        %394 = vmatprep.subr.mxu0 0.0
        %395 = vmatpush1.msra.mxu0 0.0
        %396 = vmatprep.subr.mxu0 0.0
        %397 = vmatpush1.msra.mxu0 0.0
        %398 = vmatprep.subr.mxu0 0.0
        %399 = vmatpush1.msra.mxu0 0.0
        %400 = vmatprep.subr.mxu0 0.0
        %401 = vmatpush1.msra.mxu0 0.0
        %402 = vmatprep.subr.mxu0 0.0
        %403 = vmatpush1.msra.mxu0 0.0
        %404 = vmatprep.subr.mxu0 0.0
        %405 = vmatpush1.msra.mxu0 0.0
        %406 = vmatprep.subr.mxu0 0.0
        %407 = vmatpush1.msra.mxu0 0.0
        %408 = vmatprep.subr.mxu0 0.0
        %409 = vmatpush1.msra.mxu0 0.0
        %410 = vmatprep.subr.mxu0 0.0
        %411 = vmatpush1.msra.mxu0 0.0
        %412 = vmatprep.subr.mxu0 0.0
        %413 = vmatpush1.msra.mxu0 0.0
        %414 = vmatprep.subr.mxu0 0.0
        %415 = vmatpush1.msra.mxu0 0.0
        %416 = vmatprep.mubr.f32.mxu0 0.0
        %417 = vmatmul.mubr.f32.gmra.mrb[0].mxu0 %v305
        %v418 = vpop.f32.mrb[0].mxu0
        %v419 = vadd.f32 %v302, %v418
        %v420 = vpop.f32.mrb[0].mxu0
        %421 = vmatprep.mubr.f32.mxu0 0.0
        %422 = vmatmul.mubr.f32.gmra.mrb[0].mxu0 %v308
        %v423 = vpop.f32.mrb[0].mxu0
        %v424 = vadd.f32 %v302, %v423
        %v425 = vpop.f32.mrb[0].mxu0
        %426 = vmatprep.mubr.f32.mxu0 0.0
        %427 = vmatmul.mubr.f32.gmra.mrb[0].mxu0 %v311
        %v428 = vpop.f32.mrb[0].mxu0
        %v429 = vadd.f32 %v302, %v428
        %v430 = vpop.f32.mrb[0].mxu0
        %431 = vmatprep.mubr.f32.mxu0 0.0
        %432 = vmatmul.mubr.f32.gmra.mrb[0].mxu0 %v314
        %v433 = vpop.f32.mrb[0].mxu0
        %v434 = vadd.f32 %v302, %v433
        %v435 = vpop.f32.mrb[0].mxu0
        %436 = vmatprep.mubr.f32.mxu0 0.0
        %437 = vmatmul.mubr.f32.gmra.mrb[0].mxu0 %v317
        %v438 = vpop.f32.mrb[0].mxu0
        %v439 = vadd.f32 %v302, %v438
        %v440 = vpop.f32.mrb[0].mxu0
        %441 = vmatprep.mubr.f32.mxu0 0.0
        %442 = vmatmul.mubr.f32.gmra.mrb[0].mxu0 %v320
        %v443 = vpop.f32.mrb[0].mxu0
        %v444 = vadd.f32 %v302, %v443
        %v445 = vpop.f32.mrb[0].mxu0
        %446 = vmatprep.mubr.f32.mxu0 0.0
        %447 = vmatmul.mubr.f32.gmra.mrb[0].mxu0 %v323
        %v448 = vpop.f32.mrb[0].mxu0
        %v449 = vadd.f32 %v302, %v448
        %v450 = vpop.f32.mrb[0].mxu0
        %451 = vmatprep.mubr.f32.mxu0 0.0
        %452 = vmatmul.mubr.f32.gmra.mrb[0].mxu0 %v326
        %v453 = vpop.f32.mrb[0].mxu0
        %v454 = vadd.f32 %v302, %v453
        %v455 = vpop.f32.mrb[0].mxu0
        %456 = vmatprep.mubr.f32.mxu0 0.0
        %457 = vmatmul.mubr.f32.gmra.mrb[0].mxu0 %v329
        %v458 = vpop.f32.mrb[0].mxu0
        %v459 = vadd.f32 %v302, %v458
        %v460 = vpop.f32.mrb[0].mxu0
        %461 = vmatprep.mubr.f32.mxu0 0.0
        %462 = vmatmul.mubr.f32.gmra.mrb[0].mxu0 %v332
        %v463 = vpop.f32.mrb[0].mxu0
        %v464 = vadd.f32 %v302, %v463
        %v465 = vpop.f32.mrb[0].mxu0
        %466 = vmatprep.mubr.f32.mxu0 0.0
        %467 = vmatmul.mubr.f32.gmra.mrb[0].mxu0 %v335
        %v468 = vpop.f32.mrb[0].mxu0
        %v469 = vadd.f32 %v302, %v468
        %v470 = vpop.f32.mrb[0].mxu0
        %471 = vmatprep.mubr.f32.mxu0 0.0
        %472 = vmatmul.mubr.f32.gmra.mrb[0].mxu0 %v338
        %v473 = vpop.f32.mrb[0].mxu0
        %v474 = vadd.f32 %v302, %v473
        %v475 = vpop.f32.mrb[0].mxu0
        %476 = vmatprep.mubr.f32.mxu0 0.0
        %477 = vmatmul.mubr.f32.gmra.mrb[0].mxu0 %v341
        %v478 = vpop.f32.mrb[0].mxu0
        %v479 = vadd.f32 %v302, %v478
        %v480 = vpop.f32.mrb[0].mxu0
        %481 = vmatprep.mubr.f32.mxu0 0.0
        %482 = vmatmul.mubr.f32.gmra.mrb[0].mxu0 %v344
        %v483 = vpop.f32.mrb[0].mxu0
        %v484 = vadd.f32 %v302, %v483
        %v485 = vpop.f32.mrb[0].mxu0
        %486 = vmatprep.mubr.f32.mxu0 0.0
        %487 = vmatmul.mubr.f32.gmra.mrb[0].mxu0 %v347
        %v488 = vpop.f32.mrb[0].mxu0
        %v489 = vadd.f32 %v302, %v488
        %v490 = vpop.f32.mrb[0].mxu0
        %491 = vmatprep.mubr.f32.mxu0 0.0
        %492 = vmatmul.mubr.f32.gmra.mrb[0].mxu0 %v350
        %v493 = vpop.f32.mrb[0].mxu0
        %v494 = vadd.f32 %v302, %v493
        %v495 = vpop.f32.mrb[0].mxu0
        %496 = vdwg.mxu0
        %497 = vadd.xlane.f32.xlu0 %v419
        %v498 = vpop.xlane.xlu0 %497
        %499 = vadd.xlane.f32.xlu0 %v424
        %v500 = vpop.xlane.xlu0 %499
        %501 = vadd.xlane.f32.xlu0 %v429
        %v502 = vpop.xlane.xlu0 %501
        %503 = vadd.xlane.f32.xlu0 %v434
        %v504 = vpop.xlane.xlu0 %503
        %505 = vadd.xlane.f32.xlu0 %v439
        %v506 = vpop.xlane.xlu0 %505
        %507 = vadd.xlane.f32.xlu0 %v444
        %v508 = vpop.xlane.xlu0 %507
        %509 = vadd.xlane.f32.xlu0 %v449
        %v510 = vpop.xlane.xlu0 %509
        %511 = vadd.xlane.f32.xlu0 %v454
        %v512 = vpop.xlane.xlu0 %511
        %513 = vadd.xlane.f32.xlu0 %v459
        %v514 = vpop.xlane.xlu0 %513
        %515 = vadd.xlane.f32.xlu0 %v464
        %v516 = vpop.xlane.xlu0 %515
        %517 = vadd.xlane.f32.xlu0 %v469
        %v518 = vpop.xlane.xlu0 %517
        %519 = vadd.xlane.f32.xlu0 %v474
        %v520 = vpop.xlane.xlu0 %519
        %521 = vadd.xlane.f32.xlu0 %v479
        %v522 = vpop.xlane.xlu0 %521
        %523 = vadd.xlane.f32.xlu0 %v484
        %v524 = vpop.xlane.xlu0 %523
        %525 = vadd.xlane.f32.xlu0 %v489
        %v526 = vpop.xlane.xlu0 %525
        %527 = vadd.xlane.f32.xlu0 %v494
        %v528 = vpop.xlane.xlu0 %527
        %v529 = vmul.f32 %v498, 0.015625
        %v530 = vmul.f32 %v500, 0.015625
        %v531 = vmul.f32 %v502, 0.015625
        %v532 = vmul.f32 %v504, 0.015625
        %v533 = vmul.f32 %v506, 0.015625
        %v534 = vmul.f32 %v508, 0.015625
        %v535 = vmul.f32 %v510, 0.015625
        %v536 = vmul.f32 %v512, 0.015625
        %v537 = vmul.f32 %v514, 0.015625
        %v538 = vmul.f32 %v516, 0.015625
        %v539 = vmul.f32 %v518, 0.015625
        %v540 = vmul.f32 %v520, 0.015625
        %v541 = vmul.f32 %v522, 0.015625
        %v542 = vmul.f32 %v524, 0.015625
        %v543 = vmul.f32 %v526, 0.015625
        %v544 = vmul.f32 %v528, 0.015625
        %v545 = vsub.f32 %v419, %v529
        %v546 = vsub.f32 %v424, %v530
        %v547 = vsub.f32 %v429, %v531
        %v548 = vsub.f32 %v434, %v532
        %v549 = vsub.f32 %v439, %v533
        %v550 = vsub.f32 %v444, %v534
        %v551 = vsub.f32 %v449, %v535
        %v552 = vsub.f32 %v454, %v536
        %v553 = vsub.f32 %v459, %v537
        %v554 = vsub.f32 %v464, %v538
        %v555 = vsub.f32 %v469, %v539
        %v556 = vsub.f32 %v474, %v540
        %v557 = vsub.f32 %v479, %v541
        %v558 = vsub.f32 %v484, %v542
        %v559 = vsub.f32 %v489, %v543
        %v560 = vsub.f32 %v494, %v544
        %v561 = vld [vmem:[%s4 + $0x3] sm:$0x1]
        %v562 = vlaneseq
        %v563 = vshrl.u32 %v562, 7
        %v564 = vsub.s32 0, %v563
        %v565 = vrot.slane %v561, %v564
        %v566 = vmul.f32 %v545, %v565
        %v567 = vmul.f32 %v546, %v565
        %v568 = vmul.f32 %v547, %v565
        %v569 = vmul.f32 %v548, %v565
        %v570 = vmul.f32 %v549, %v565
        %v571 = vmul.f32 %v550, %v565
        %v572 = vmul.f32 %v551, %v565
        %v573 = vmul.f32 %v552, %v565
        %v574 = vmul.f32 %v553, %v565
        %v575 = vmul.f32 %v554, %v565
        %v576 = vmul.f32 %v555, %v565
        %v577 = vmul.f32 %v556, %v565
        %v578 = vmul.f32 %v557, %v565
        %v579 = vmul.f32 %v558, %v565
        %v580 = vmul.f32 %v559, %v565
        %v581 = vmul.f32 %v560, %v565
        %v582 = vmul.f32 %v566, %v566
        %v583 = vmul.f32 %v567, %v567
        %v584 = vmul.f32 %v568, %v568
        %v585 = vmul.f32 %v569, %v569
        %v586 = vmul.f32 %v570, %v570
        %v587 = vmul.f32 %v571, %v571
        %v588 = vmul.f32 %v572, %v572
        %v589 = vmul.f32 %v573, %v573
        %v590 = vmul.f32 %v574, %v574
        %v591 = vmul.f32 %v575, %v575
        %v592 = vmul.f32 %v576, %v576
        %v593 = vmul.f32 %v577, %v577
        %v594 = vmul.f32 %v578, %v578
        %v595 = vmul.f32 %v579, %v579
        %v596 = vmul.f32 %v580, %v580
        %v597 = vmul.f32 %v581, %v581
        %598 = vadd.xlane.f32.xlu0 %v582
        %v599 = vpop.xlane.xlu0 %598
        %600 = vadd.xlane.f32.xlu0 %v583
        %v601 = vpop.xlane.xlu0 %600
        %602 = vadd.xlane.f32.xlu0 %v584
        %v603 = vpop.xlane.xlu0 %602
        %604 = vadd.xlane.f32.xlu0 %v585
        %v605 = vpop.xlane.xlu0 %604
        %606 = vadd.xlane.f32.xlu0 %v586
        %v607 = vpop.xlane.xlu0 %606
        %608 = vadd.xlane.f32.xlu0 %v587
        %v609 = vpop.xlane.xlu0 %608
        %610 = vadd.xlane.f32.xlu0 %v588
        %v611 = vpop.xlane.xlu0 %610
        %612 = vadd.xlane.f32.xlu0 %v589
        %v613 = vpop.xlane.xlu0 %612
        %614 = vadd.xlane.f32.xlu0 %v590
        %v615 = vpop.xlane.xlu0 %614
        %616 = vadd.xlane.f32.xlu0 %v591
        %v617 = vpop.xlane.xlu0 %616
        %618 = vadd.xlane.f32.xlu0 %v592
        %v619 = vpop.xlane.xlu0 %618
        %620 = vadd.xlane.f32.xlu0 %v593
        %v621 = vpop.xlane.xlu0 %620
        %622 = vadd.xlane.f32.xlu0 %v594
        %v623 = vpop.xlane.xlu0 %622
        %624 = vadd.xlane.f32.xlu0 %v595
        %v625 = vpop.xlane.xlu0 %624
        %626 = vadd.xlane.f32.xlu0 %v596
        %v627 = vpop.xlane.xlu0 %626
        %628 = vadd.xlane.f32.xlu0 %v597
        %v629 = vpop.xlane.xlu0 %628
        %v630 = vmul.f32 %v599, 0.015625
        %v631 = vmul.f32 %v601, 0.015625
        %v632 = vmul.f32 %v603, 0.015625
        %v633 = vmul.f32 %v605, 0.015625
        %v634 = vmul.f32 %v607, 0.015625
        %v635 = vmul.f32 %v609, 0.015625
        %v636 = vmul.f32 %v611, 0.015625
        %v637 = vmul.f32 %v613, 0.015625
        %v638 = vmul.f32 %v615, 0.015625
        %v639 = vmul.f32 %v617, 0.015625
        %v640 = vmul.f32 %v619, 0.015625
        %v641 = vmul.f32 %v621, 0.015625
        %v642 = vmul.f32 %v623, 0.015625
        %v643 = vmul.f32 %v625, 0.015625
        %v644 = vmul.f32 %v627, 0.015625
        %v645 = vmul.f32 %v629, 0.015625
        %v646 = vadd.f32 %v630, 1e-05
        %v647 = vadd.f32 %v631, 1e-05
        %v648 = vadd.f32 %v632, 1e-05
        %v649 = vadd.f32 %v633, 1e-05
        %v650 = vadd.f32 %v634, 1e-05
        %v651 = vadd.f32 %v635, 1e-05
        %v652 = vadd.f32 %v636, 1e-05
        %v653 = vadd.f32 %v637, 1e-05
        %v654 = vadd.f32 %v638, 1e-05
        %v655 = vadd.f32 %v639, 1e-05
        %v656 = vadd.f32 %v640, 1e-05
        %v657 = vadd.f32 %v641, 1e-05
        %v658 = vadd.f32 %v642, 1e-05
        %v659 = vadd.f32 %v643, 1e-05
        %v660 = vadd.f32 %v644, 1e-05
        %v661 = vadd.f32 %v645, 1e-05
        %v662 = vrsqrt.pop %v646
        %v663 = vrsqrt.pop %v647
        %v664 = vrsqrt.pop %v648
        %v665 = vrsqrt.pop %v649
        %v666 = vrsqrt.pop %v650
        %v667 = vrsqrt.pop %v651
        %v668 = vrsqrt.pop %v652
        %v669 = vrsqrt.pop %v653
        %v670 = vrsqrt.pop %v654
        %v671 = vrsqrt.pop %v655
        %v672 = vrsqrt.pop %v656
        %v673 = vrsqrt.pop %v657
        %v674 = vrsqrt.pop %v658
        %v675 = vrsqrt.pop %v659
        %v676 = vrsqrt.pop %v660
        %v677 = vrsqrt.pop %v661
        %v678 = vmul.f32 %v566, %v662
        %v679 = vmul.f32 %v567, %v663
        %v680 = vmul.f32 %v568, %v664
        %v681 = vmul.f32 %v569, %v665
        %v682 = vmul.f32 %v570, %v666
        %v683 = vmul.f32 %v571, %v667
        %v684 = vmul.f32 %v572, %v668
        %v685 = vmul.f32 %v573, %v669
        %v686 = vmul.f32 %v574, %v670
        %v687 = vmul.f32 %v575, %v671
        %v688 = vmul.f32 %v576, %v672
        %v689 = vmul.f32 %v577, %v673
        %v690 = vmul.f32 %v578, %v674
        %v691 = vmul.f32 %v579, %v675
        %v692 = vmul.f32 %v580, %v676
        %v693 = vmul.f32 %v581, %v677
        %v694 = vld [vmem:[%s4 + $0x1] sm:$0x1]
        %v695 = vlaneseq
        %v696 = vshrl.u32 %v695, 7
        %v697 = vsub.s32 0, %v696
        %v698 = vrot.slane %v694, %v697
        %v699 = vmul.f32 %v678, %v698
        %v700 = vmul.f32 %v679, %v698
        %v701 = vmul.f32 %v680, %v698
        %v702 = vmul.f32 %v681, %v698
        %v703 = vmul.f32 %v682, %v698
        %v704 = vmul.f32 %v683, %v698
        %v705 = vmul.f32 %v684, %v698
        %v706 = vmul.f32 %v685, %v698
        %v707 = vmul.f32 %v686, %v698
        %v708 = vmul.f32 %v687, %v698
        %v709 = vmul.f32 %v688, %v698
        %v710 = vmul.f32 %v689, %v698
        %v711 = vmul.f32 %v690, %v698
        %v712 = vmul.f32 %v691, %v698
        %v713 = vmul.f32 %v692, %v698
        %v714 = vmul.f32 %v693, %v698
        %v715 = vld [vmem:[%s4 + $0x2] sm:$0x1]
        %v716 = vlaneseq
        %v717 = vshrl.u32 %v716, 7
        %v718 = vsub.s32 0, %v717
        %v719 = vrot.slane %v715, %v718
        %v720 = vadd.f32 %v699, %v719
        %v721 = vadd.f32 %v700, %v719
        %v722 = vadd.f32 %v701, %v719
        %v723 = vadd.f32 %v702, %v719
        %v724 = vadd.f32 %v703, %v719
        %v725 = vadd.f32 %v704, %v719
        %v726 = vadd.f32 %v705, %v719
        %v727 = vadd.f32 %v706, %v719
        %v728 = vadd.f32 %v707, %v719
        %v729 = vadd.f32 %v708, %v719
        %v730 = vadd.f32 %v709, %v719
        %v731 = vadd.f32 %v710, %v719
        %v732 = vadd.f32 %v711, %v719
        %v733 = vadd.f32 %v712, %v719
        %v734 = vadd.f32 %v713, %v719
        %v735 = vadd.f32 %v714, %v719
        %v736 = vmax.f32 %v720, 0.0
        %v737 = vmax.f32 %v721, 0.0
        %v738 = vmax.f32 %v722, 0.0
        %v739 = vmax.f32 %v723, 0.0
        %v740 = vmax.f32 %v724, 0.0
        %v741 = vmax.f32 %v725, 0.0
        %v742 = vmax.f32 %v726, 0.0
        %v743 = vmax.f32 %v727, 0.0
        %v744 = vmax.f32 %v728, 0.0
        %v745 = vmax.f32 %v729, 0.0
        %v746 = vmax.f32 %v730, 0.0
        %v747 = vmax.f32 %v731, 0.0
        %v748 = vmax.f32 %v732, 0.0
        %v749 = vmax.f32 %v733, 0.0
        %v750 = vmax.f32 %v734, 0.0
        %v751 = vmax.f32 %v735, 0.0
        %v752 = vld [vmem:[%s2] sm:$0xff]
        %v753 = vld [vmem:[%s2 + $0x8] sm:$0xff]
        %v754 = vld [vmem:[%s2 + $0x10] sm:$0xff]
        %v755 = vld [vmem:[%s2 + $0x18] sm:$0xff]
        %v756 = vld [vmem:[%s2 + $0x20] sm:$0xff]
        %v757 = vld [vmem:[%s2 + $0x28] sm:$0xff]
        %v758 = vld [vmem:[%s2 + $0x30] sm:$0xff]
        %v759 = vld [vmem:[%s2 + $0x38] sm:$0xff]
        %v760 = vld [vmem:[%s2 + $0x40] sm:$0xff]
        %v761 = vld [vmem:[%s2 + $0x48] sm:$0xff]
        %v762 = vld [vmem:[%s2 + $0x50] sm:$0xff]
        %v763 = vld [vmem:[%s2 + $0x58] sm:$0xff]
        %v764 = vld [vmem:[%s2 + $0x60] sm:$0xff]
        %v765 = vld [vmem:[%s2 + $0x68] sm:$0xff]
        %v766 = vld [vmem:[%s2 + $0x70] sm:$0xff]
        %v767 = vld [vmem:[%s2 + $0x78] sm:$0xff]
        %v768 = vld [vmem:[%s5] sm:$0x1]
        %v769 = vlaneseq
        %v770 = vshrl.u32 %v769, 7
        %v771 = vsub.s32 0, %v770
        %v772 = vrot.slane %v768, %v771
        %773 = vmatprep.subr.mxu0 0.0
        %774 = vmatpush1.msra.mxu0 %v752
        %775 = vmatprep.subr.mxu0 0.0
        %776 = vmatpush1.msra.mxu0 %v753
        %777 = vmatprep.subr.mxu0 0.0
        %778 = vmatpush1.msra.mxu0 %v754
        %779 = vmatprep.subr.mxu0 0.0
        %780 = vmatpush1.msra.mxu0 %v755
        %781 = vmatprep.subr.mxu0 0.0
        %782 = vmatpush1.msra.mxu0 %v756
        %783 = vmatprep.subr.mxu0 0.0
        %784 = vmatpush1.msra.mxu0 %v757
        %785 = vmatprep.subr.mxu0 0.0
        %786 = vmatpush1.msra.mxu0 %v758
        %787 = vmatprep.subr.mxu0 0.0
        %788 = vmatpush1.msra.mxu0 %v759
        %789 = vmatprep.subr.mxu0 0.0
        %790 = vmatpush1.msra.mxu0 %v760
        %791 = vmatprep.subr.mxu0 0.0
        %792 = vmatpush1.msra.mxu0 %v761
        %793 = vmatprep.subr.mxu0 0.0
        %794 = vmatpush1.msra.mxu0 %v762
        %795 = vmatprep.subr.mxu0 0.0
        %796 = vmatpush1.msra.mxu0 %v763
        %797 = vmatprep.subr.mxu0 0.0
        %798 = vmatpush1.msra.mxu0 %v764
        %799 = vmatprep.subr.mxu0 0.0
        %800 = vmatpush1.msra.mxu0 %v765
        %801 = vmatprep.subr.mxu0 0.0
        %802 = vmatpush1.msra.mxu0 %v766
        %803 = vmatprep.subr.mxu0 0.0
        %804 = vmatpush1.msra.mxu0 %v767
        %805 = vmatprep.subr.mxu0 0.0
        %806 = vmatpush1.msra.mxu0 0.0
        %807 = vmatprep.subr.mxu0 0.0
        %808 = vmatpush1.msra.mxu0 0.0
        %809 = vmatprep.subr.mxu0 0.0
        %810 = vmatpush1.msra.mxu0 0.0
        %811 = vmatprep.subr.mxu0 0.0
        %812 = vmatpush1.msra.mxu0 0.0
        %813 = vmatprep.subr.mxu0 0.0
        %814 = vmatpush1.msra.mxu0 0.0
        %815 = vmatprep.subr.mxu0 0.0
        %816 = vmatpush1.msra.mxu0 0.0
        %817 = vmatprep.subr.mxu0 0.0
        %818 = vmatpush1.msra.mxu0 0.0
        %819 = vmatprep.subr.mxu0 0.0
        %820 = vmatpush1.msra.mxu0 0.0
        %821 = vmatprep.subr.mxu0 0.0
        %822 = vmatpush1.msra.mxu0 0.0
        %823 = vmatprep.subr.mxu0 0.0
        %824 = vmatpush1.msra.mxu0 0.0
        %825 = vmatprep.subr.mxu0 0.0
        %826 = vmatpush1.msra.mxu0 0.0
        %827 = vmatprep.subr.mxu0 0.0
        %828 = vmatpush1.msra.mxu0 0.0
        %829 = vmatprep.subr.mxu0 0.0
        %830 = vmatpush1.msra.mxu0 0.0
        %831 = vmatprep.subr.mxu0 0.0
        %832 = vmatpush1.msra.mxu0 0.0
        %833 = vmatprep.subr.mxu0 0.0
        %834 = vmatpush1.msra.mxu0 0.0
        %835 = vmatprep.subr.mxu0 0.0
        %836 = vmatpush1.msra.mxu0 0.0
        %837 = vmatprep.mubr.f32.mxu0 0.0
        %838 = vmatmul.mubr.f32.gmra.mrb[0].mxu0 %v736
        %v839 = vpop.f32.mrb[0].mxu0
        %v840 = vadd.f32 %v772, %v839
        %v841 = vpop.f32.mrb[0].mxu0
        %842 = vmatprep.mubr.f32.mxu0 0.0
        %843 = vmatmul.mubr.f32.gmra.mrb[0].mxu0 %v737
        %v844 = vpop.f32.mrb[0].mxu0
        %v845 = vadd.f32 %v772, %v844
        %v846 = vpop.f32.mrb[0].mxu0
        %847 = vmatprep.mubr.f32.mxu0 0.0
        %848 = vmatmul.mubr.f32.gmra.mrb[0].mxu0 %v738
        %v849 = vpop.f32.mrb[0].mxu0
        %v850 = vadd.f32 %v772, %v849
        %v851 = vpop.f32.mrb[0].mxu0
        %852 = vmatprep.mubr.f32.mxu0 0.0
        %853 = vmatmul.mubr.f32.gmra.mrb[0].mxu0 %v739
        %v854 = vpop.f32.mrb[0].mxu0
        %v855 = vadd.f32 %v772, %v854
        %v856 = vpop.f32.mrb[0].mxu0
        %857 = vmatprep.mubr.f32.mxu0 0.0
        %858 = vmatmul.mubr.f32.gmra.mrb[0].mxu0 %v740
        %v859 = vpop.f32.mrb[0].mxu0
        %v860 = vadd.f32 %v772, %v859
        %v861 = vpop.f32.mrb[0].mxu0
        %862 = vmatprep.mubr.f32.mxu0 0.0
        %863 = vmatmul.mubr.f32.gmra.mrb[0].mxu0 %v741
        %v864 = vpop.f32.mrb[0].mxu0
        %v865 = vadd.f32 %v772, %v864
        %v866 = vpop.f32.mrb[0].mxu0
        %867 = vmatprep.mubr.f32.mxu0 0.0
        %868 = vmatmul.mubr.f32.gmra.mrb[0].mxu0 %v742
        %v869 = vpop.f32.mrb[0].mxu0
        %v870 = vadd.f32 %v772, %v869
        %v871 = vpop.f32.mrb[0].mxu0
        %872 = vmatprep.mubr.f32.mxu0 0.0
        %873 = vmatmul.mubr.f32.gmra.mrb[0].mxu0 %v743
        %v874 = vpop.f32.mrb[0].mxu0
        %v875 = vadd.f32 %v772, %v874
        %v876 = vpop.f32.mrb[0].mxu0
        %877 = vmatprep.mubr.f32.mxu0 0.0
        %878 = vmatmul.mubr.f32.gmra.mrb[0].mxu0 %v744
        %v879 = vpop.f32.mrb[0].mxu0
        %v880 = vadd.f32 %v772, %v879
        %v881 = vpop.f32.mrb[0].mxu0
        %882 = vmatprep.mubr.f32.mxu0 0.0
        %883 = vmatmul.mubr.f32.gmra.mrb[0].mxu0 %v745
        %v884 = vpop.f32.mrb[0].mxu0
        %v885 = vadd.f32 %v772, %v884
        %v886 = vpop.f32.mrb[0].mxu0
        %887 = vmatprep.mubr.f32.mxu0 0.0
        %888 = vmatmul.mubr.f32.gmra.mrb[0].mxu0 %v746
        %v889 = vpop.f32.mrb[0].mxu0
        %v890 = vadd.f32 %v772, %v889
        %v891 = vpop.f32.mrb[0].mxu0
        %892 = vmatprep.mubr.f32.mxu0 0.0
        %893 = vmatmul.mubr.f32.gmra.mrb[0].mxu0 %v747
        %v894 = vpop.f32.mrb[0].mxu0
        %v895 = vadd.f32 %v772, %v894
        %v896 = vpop.f32.mrb[0].mxu0
        %897 = vmatprep.mubr.f32.mxu0 0.0
        %898 = vmatmul.mubr.f32.gmra.mrb[0].mxu0 %v748
        %v899 = vpop.f32.mrb[0].mxu0
        %v900 = vadd.f32 %v772, %v899
        %v901 = vpop.f32.mrb[0].mxu0
        %902 = vmatprep.mubr.f32.mxu0 0.0
        %903 = vmatmul.mubr.f32.gmra.mrb[0].mxu0 %v749
        %v904 = vpop.f32.mrb[0].mxu0
        %v905 = vadd.f32 %v772, %v904
        %v906 = vpop.f32.mrb[0].mxu0
        %907 = vmatprep.mubr.f32.mxu0 0.0
        %908 = vmatmul.mubr.f32.gmra.mrb[0].mxu0 %v750
        %v909 = vpop.f32.mrb[0].mxu0
        %v910 = vadd.f32 %v772, %v909
        %v911 = vpop.f32.mrb[0].mxu0
        %912 = vmatprep.mubr.f32.mxu0 0.0
        %913 = vmatmul.mubr.f32.gmra.mrb[0].mxu0 %v751
        %v914 = vpop.f32.mrb[0].mxu0
        %v915 = vadd.f32 %v772, %v914
        %v916 = vpop.f32.mrb[0].mxu0
        %917 = vdwg.mxu0
        %918 = vadd.xlane.f32.xlu0 %v840
        %v919 = vpop.xlane.xlu0 %918
        %920 = vadd.xlane.f32.xlu0 %v845
        %v921 = vpop.xlane.xlu0 %920
        %922 = vadd.xlane.f32.xlu0 %v850
        %v923 = vpop.xlane.xlu0 %922
        %924 = vadd.xlane.f32.xlu0 %v855
        %v925 = vpop.xlane.xlu0 %924
        %926 = vadd.xlane.f32.xlu0 %v860
        %v927 = vpop.xlane.xlu0 %926
        %928 = vadd.xlane.f32.xlu0 %v865
        %v929 = vpop.xlane.xlu0 %928
        %930 = vadd.xlane.f32.xlu0 %v870
        %v931 = vpop.xlane.xlu0 %930
        %932 = vadd.xlane.f32.xlu0 %v875
        %v933 = vpop.xlane.xlu0 %932
        %934 = vadd.xlane.f32.xlu0 %v880
        %v935 = vpop.xlane.xlu0 %934
        %936 = vadd.xlane.f32.xlu0 %v885
        %v937 = vpop.xlane.xlu0 %936
        %938 = vadd.xlane.f32.xlu0 %v890
        %v939 = vpop.xlane.xlu0 %938
        %940 = vadd.xlane.f32.xlu0 %v895
        %v941 = vpop.xlane.xlu0 %940
        %942 = vadd.xlane.f32.xlu0 %v900
        %v943 = vpop.xlane.xlu0 %942
        %944 = vadd.xlane.f32.xlu0 %v905
        %v945 = vpop.xlane.xlu0 %944
        %946 = vadd.xlane.f32.xlu0 %v910
        %v947 = vpop.xlane.xlu0 %946
        %948 = vadd.xlane.f32.xlu0 %v915
        %v949 = vpop.xlane.xlu0 %948
        %v950 = vmul.f32 %v919, 0.015625
        %v951 = vmul.f32 %v921, 0.015625
        %v952 = vmul.f32 %v923, 0.015625
        %v953 = vmul.f32 %v925, 0.015625
        %v954 = vmul.f32 %v927, 0.015625
        %v955 = vmul.f32 %v929, 0.015625
        %v956 = vmul.f32 %v931, 0.015625
        %v957 = vmul.f32 %v933, 0.015625
        %v958 = vmul.f32 %v935, 0.015625
        %v959 = vmul.f32 %v937, 0.015625
        %v960 = vmul.f32 %v939, 0.015625
        %v961 = vmul.f32 %v941, 0.015625
        %v962 = vmul.f32 %v943, 0.015625
        %v963 = vmul.f32 %v945, 0.015625
        %v964 = vmul.f32 %v947, 0.015625
        %v965 = vmul.f32 %v949, 0.015625
        %v966 = vsub.f32 %v840, %v950
        %v967 = vsub.f32 %v845, %v951
        %v968 = vsub.f32 %v850, %v952
        %v969 = vsub.f32 %v855, %v953
        %v970 = vsub.f32 %v860, %v954
        %v971 = vsub.f32 %v865, %v955
        %v972 = vsub.f32 %v870, %v956
        %v973 = vsub.f32 %v875, %v957
        %v974 = vsub.f32 %v880, %v958
        %v975 = vsub.f32 %v885, %v959
        %v976 = vsub.f32 %v890, %v960
        %v977 = vsub.f32 %v895, %v961
        %v978 = vsub.f32 %v900, %v962
        %v979 = vsub.f32 %v905, %v963
        %v980 = vsub.f32 %v910, %v964
        %v981 = vsub.f32 %v915, %v965
        %v982 = vld [vmem:[%s5 + $0x3] sm:$0x1]
        %v983 = vlaneseq
        %v984 = vshrl.u32 %v983, 7
        %v985 = vsub.s32 0, %v984
        %v986 = vrot.slane %v982, %v985
        %v987 = vmul.f32 %v966, %v986
        %v988 = vmul.f32 %v967, %v986
        %v989 = vmul.f32 %v968, %v986
        %v990 = vmul.f32 %v969, %v986
        %v991 = vmul.f32 %v970, %v986
        %v992 = vmul.f32 %v971, %v986
        %v993 = vmul.f32 %v972, %v986
        %v994 = vmul.f32 %v973, %v986
        %v995 = vmul.f32 %v974, %v986
        %v996 = vmul.f32 %v975, %v986
        %v997 = vmul.f32 %v976, %v986
        %v998 = vmul.f32 %v977, %v986
        %v999 = vmul.f32 %v978, %v986
        %v1000 = vmul.f32 %v979, %v986
        %v1001 = vmul.f32 %v980, %v986
        %v1002 = vmul.f32 %v981, %v986
        %v1003 = vmul.f32 %v987, %v987
        %v1004 = vmul.f32 %v988, %v988
        %v1005 = vmul.f32 %v989, %v989
        %v1006 = vmul.f32 %v990, %v990
        %v1007 = vmul.f32 %v991, %v991
        %v1008 = vmul.f32 %v992, %v992
        %v1009 = vmul.f32 %v993, %v993
        %v1010 = vmul.f32 %v994, %v994
        %v1011 = vmul.f32 %v995, %v995
        %v1012 = vmul.f32 %v996, %v996
        %v1013 = vmul.f32 %v997, %v997
        %v1014 = vmul.f32 %v998, %v998
        %v1015 = vmul.f32 %v999, %v999
        %v1016 = vmul.f32 %v1000, %v1000
        %v1017 = vmul.f32 %v1001, %v1001
        %v1018 = vmul.f32 %v1002, %v1002
        %1019 = vadd.xlane.f32.xlu0 %v1003
        %v1020 = vpop.xlane.xlu0 %1019
        %1021 = vadd.xlane.f32.xlu0 %v1004
        %v1022 = vpop.xlane.xlu0 %1021
        %1023 = vadd.xlane.f32.xlu0 %v1005
        %v1024 = vpop.xlane.xlu0 %1023
        %1025 = vadd.xlane.f32.xlu0 %v1006
        %v1026 = vpop.xlane.xlu0 %1025
        %1027 = vadd.xlane.f32.xlu0 %v1007
        %v1028 = vpop.xlane.xlu0 %1027
        %1029 = vadd.xlane.f32.xlu0 %v1008
        %v1030 = vpop.xlane.xlu0 %1029
        %1031 = vadd.xlane.f32.xlu0 %v1009
        %v1032 = vpop.xlane.xlu0 %1031
        %1033 = vadd.xlane.f32.xlu0 %v1010
        %v1034 = vpop.xlane.xlu0 %1033
        %1035 = vadd.xlane.f32.xlu0 %v1011
        %v1036 = vpop.xlane.xlu0 %1035
        %1037 = vadd.xlane.f32.xlu0 %v1012
        %v1038 = vpop.xlane.xlu0 %1037
        %1039 = vadd.xlane.f32.xlu0 %v1013
        %v1040 = vpop.xlane.xlu0 %1039
        %1041 = vadd.xlane.f32.xlu0 %v1014
        %v1042 = vpop.xlane.xlu0 %1041
        %1043 = vadd.xlane.f32.xlu0 %v1015
        %v1044 = vpop.xlane.xlu0 %1043
        %1045 = vadd.xlane.f32.xlu0 %v1016
        %v1046 = vpop.xlane.xlu0 %1045
        %1047 = vadd.xlane.f32.xlu0 %v1017
        %v1048 = vpop.xlane.xlu0 %1047
        %1049 = vadd.xlane.f32.xlu0 %v1018
        %v1050 = vpop.xlane.xlu0 %1049
        %v1051 = vmul.f32 %v1020, 0.015625
        %v1052 = vmul.f32 %v1022, 0.015625
        %v1053 = vmul.f32 %v1024, 0.015625
        %v1054 = vmul.f32 %v1026, 0.015625
        %v1055 = vmul.f32 %v1028, 0.015625
        %v1056 = vmul.f32 %v1030, 0.015625
        %v1057 = vmul.f32 %v1032, 0.015625
        %v1058 = vmul.f32 %v1034, 0.015625
        %v1059 = vmul.f32 %v1036, 0.015625
        %v1060 = vmul.f32 %v1038, 0.015625
        %v1061 = vmul.f32 %v1040, 0.015625
        %v1062 = vmul.f32 %v1042, 0.015625
        %v1063 = vmul.f32 %v1044, 0.015625
        %v1064 = vmul.f32 %v1046, 0.015625
        %v1065 = vmul.f32 %v1048, 0.015625
        %v1066 = vmul.f32 %v1050, 0.015625
        %v1067 = vadd.f32 %v1051, 1e-05
        %v1068 = vadd.f32 %v1052, 1e-05
        %v1069 = vadd.f32 %v1053, 1e-05
        %v1070 = vadd.f32 %v1054, 1e-05
        %v1071 = vadd.f32 %v1055, 1e-05
        %v1072 = vadd.f32 %v1056, 1e-05
        %v1073 = vadd.f32 %v1057, 1e-05
        %v1074 = vadd.f32 %v1058, 1e-05
        %v1075 = vadd.f32 %v1059, 1e-05
        %v1076 = vadd.f32 %v1060, 1e-05
        %v1077 = vadd.f32 %v1061, 1e-05
        %v1078 = vadd.f32 %v1062, 1e-05
        %v1079 = vadd.f32 %v1063, 1e-05
        %v1080 = vadd.f32 %v1064, 1e-05
        %v1081 = vadd.f32 %v1065, 1e-05
        %v1082 = vadd.f32 %v1066, 1e-05
        %v1083 = vrsqrt.pop %v1067
        %v1084 = vrsqrt.pop %v1068
        %v1085 = vrsqrt.pop %v1069
        %v1086 = vrsqrt.pop %v1070
        %v1087 = vrsqrt.pop %v1071
        %v1088 = vrsqrt.pop %v1072
        %v1089 = vrsqrt.pop %v1073
        %v1090 = vrsqrt.pop %v1074
        %v1091 = vrsqrt.pop %v1075
        %v1092 = vrsqrt.pop %v1076
        %v1093 = vrsqrt.pop %v1077
        %v1094 = vrsqrt.pop %v1078
        %v1095 = vrsqrt.pop %v1079
        %v1096 = vrsqrt.pop %v1080
        %v1097 = vrsqrt.pop %v1081
        %v1098 = vrsqrt.pop %v1082
        %v1099 = vmul.f32 %v987, %v1083
        %v1100 = vmul.f32 %v988, %v1084
        %v1101 = vmul.f32 %v989, %v1085
        %v1102 = vmul.f32 %v990, %v1086
        %v1103 = vmul.f32 %v991, %v1087
        %v1104 = vmul.f32 %v992, %v1088
        %v1105 = vmul.f32 %v993, %v1089
        %v1106 = vmul.f32 %v994, %v1090
        %v1107 = vmul.f32 %v995, %v1091
        %v1108 = vmul.f32 %v996, %v1092
        %v1109 = vmul.f32 %v997, %v1093
        %v1110 = vmul.f32 %v998, %v1094
        %v1111 = vmul.f32 %v999, %v1095
        %v1112 = vmul.f32 %v1000, %v1096
        %v1113 = vmul.f32 %v1001, %v1097
        %v1114 = vmul.f32 %v1002, %v1098
        %v1115 = vld [vmem:[%s5 + $0x1] sm:$0x1]
        %v1116 = vlaneseq
        %v1117 = vshrl.u32 %v1116, 7
        %v1118 = vsub.s32 0, %v1117
        %v1119 = vrot.slane %v1115, %v1118
        %v1120 = vmul.f32 %v1099, %v1119
        %v1121 = vmul.f32 %v1100, %v1119
        %v1122 = vmul.f32 %v1101, %v1119
        %v1123 = vmul.f32 %v1102, %v1119
        %v1124 = vmul.f32 %v1103, %v1119
        %v1125 = vmul.f32 %v1104, %v1119
        %v1126 = vmul.f32 %v1105, %v1119
        %v1127 = vmul.f32 %v1106, %v1119
        %v1128 = vmul.f32 %v1107, %v1119
        %v1129 = vmul.f32 %v1108, %v1119
        %v1130 = vmul.f32 %v1109, %v1119
        %v1131 = vmul.f32 %v1110, %v1119
        %v1132 = vmul.f32 %v1111, %v1119
        %v1133 = vmul.f32 %v1112, %v1119
        %v1134 = vmul.f32 %v1113, %v1119
        %v1135 = vmul.f32 %v1114, %v1119
        %v1136 = vld [vmem:[%s5 + $0x2] sm:$0x1]
        %v1137 = vlaneseq
        %v1138 = vshrl.u32 %v1137, 7
        %v1139 = vsub.s32 0, %v1138
        %v1140 = vrot.slane %v1136, %v1139
        %v1141 = vadd.f32 %v1120, %v1140
        %v1142 = vadd.f32 %v1121, %v1140
        %v1143 = vadd.f32 %v1122, %v1140
        %v1144 = vadd.f32 %v1123, %v1140
        %v1145 = vadd.f32 %v1124, %v1140
        %v1146 = vadd.f32 %v1125, %v1140
        %v1147 = vadd.f32 %v1126, %v1140
        %v1148 = vadd.f32 %v1127, %v1140
        %v1149 = vadd.f32 %v1128, %v1140
        %v1150 = vadd.f32 %v1129, %v1140
        %v1151 = vadd.f32 %v1130, %v1140
        %v1152 = vadd.f32 %v1131, %v1140
        %v1153 = vadd.f32 %v1132, %v1140
        %v1154 = vadd.f32 %v1133, %v1140
        %v1155 = vadd.f32 %v1134, %v1140
        %v1156 = vadd.f32 %v1135, %v1140
        %v1157 = vmax.f32 %v1141, 0.0
        %v1158 = vmax.f32 %v1142, 0.0
        %v1159 = vmax.f32 %v1143, 0.0
        %v1160 = vmax.f32 %v1144, 0.0
        %v1161 = vmax.f32 %v1145, 0.0
        %v1162 = vmax.f32 %v1146, 0.0
        %v1163 = vmax.f32 %v1147, 0.0
        %v1164 = vmax.f32 %v1148, 0.0
        %v1165 = vmax.f32 %v1149, 0.0
        %v1166 = vmax.f32 %v1150, 0.0
        %v1167 = vmax.f32 %v1151, 0.0
        %v1168 = vmax.f32 %v1152, 0.0
        %v1169 = vmax.f32 %v1153, 0.0
        %v1170 = vmax.f32 %v1154, 0.0
        %v1171 = vmax.f32 %v1155, 0.0
        %v1172 = vmax.f32 %v1156, 0.0
        %v1173 = vld [vmem:[%s3] sm:$0xff]
        %v1174 = vld [vmem:[%s3 + $0x8] sm:$0xff]
        %v1175 = vld [vmem:[%s3 + $0x10] sm:$0xff]
        %v1176 = vld [vmem:[%s3 + $0x18] sm:$0xff]
        %v1177 = vld [vmem:[%s3 + $0x20] sm:$0xff]
        %v1178 = vld [vmem:[%s3 + $0x28] sm:$0xff]
        %v1179 = vld [vmem:[%s3 + $0x30] sm:$0xff]
        %v1180 = vld [vmem:[%s3 + $0x38] sm:$0xff]
        %v1181 = vld [vmem:[%s3 + $0x40] sm:$0xff]
        %v1182 = vld [vmem:[%s3 + $0x48] sm:$0xff]
        %v1183 = vld [vmem:[%s3 + $0x50] sm:$0xff]
        %v1184 = vld [vmem:[%s3 + $0x58] sm:$0xff]
        %v1185 = vld [vmem:[%s3 + $0x60] sm:$0xff]
        %v1186 = vld [vmem:[%s3 + $0x68] sm:$0xff]
        %v1187 = vld [vmem:[%s3 + $0x70] sm:$0xff]
        %v1188 = vld [vmem:[%s3 + $0x78] sm:$0xff]
        %v1189 = vld [vmem:[%s6] sm:$0x1]
        %v1191 = vlaneseq
        %v1192 = vshrl.u32 %v1191, 7
        %v1193 = vsub.s32 0, %v1192
        %v1194 = vrot.slane %v1189, %v1193
        %1196 = vmatprep.subr.mxu0 0.0
        %1197 = vmatpush1.msra.mxu0 %v1173
        %1198 = vmatprep.subr.mxu0 0.0
        %1199 = vmatpush1.msra.mxu0 %v1174
        %1200 = vmatprep.subr.mxu0 0.0
        %1201 = vmatpush1.msra.mxu0 %v1175
        %1202 = vmatprep.subr.mxu0 0.0
        %1203 = vmatpush1.msra.mxu0 %v1176
        %1204 = vmatprep.subr.mxu0 0.0
        %1205 = vmatpush1.msra.mxu0 %v1177
        %1206 = vmatprep.subr.mxu0 0.0
        %1207 = vmatpush1.msra.mxu0 %v1178
        %1208 = vmatprep.subr.mxu0 0.0
        %1209 = vmatpush1.msra.mxu0 %v1179
        %1210 = vmatprep.subr.mxu0 0.0
        %1211 = vmatpush1.msra.mxu0 %v1180
        %1212 = vmatprep.subr.mxu0 0.0
        %1213 = vmatpush1.msra.mxu0 %v1181
        %1214 = vmatprep.subr.mxu0 0.0
        %1215 = vmatpush1.msra.mxu0 %v1182
        %1216 = vmatprep.subr.mxu0 0.0
        %1217 = vmatpush1.msra.mxu0 %v1183
        %1218 = vmatprep.subr.mxu0 0.0
        %1219 = vmatpush1.msra.mxu0 %v1184
        %1220 = vmatprep.subr.mxu0 0.0
        %1221 = vmatpush1.msra.mxu0 %v1185
        %1222 = vmatprep.subr.mxu0 0.0
        %1223 = vmatpush1.msra.mxu0 %v1186
        %1224 = vmatprep.subr.mxu0 0.0
        %1225 = vmatpush1.msra.mxu0 %v1187
        %1226 = vmatprep.subr.mxu0 0.0
        %1227 = vmatpush1.msra.mxu0 %v1188
        %1228 = vmatprep.subr.mxu0 0.0
        %1229 = vmatpush1.msra.mxu0 0.0
        %1230 = vmatprep.subr.mxu0 0.0
        %1231 = vmatpush1.msra.mxu0 0.0
        %1232 = vmatprep.subr.mxu0 0.0
        %1233 = vmatpush1.msra.mxu0 0.0
        %1234 = vmatprep.subr.mxu0 0.0
        %1235 = vmatpush1.msra.mxu0 0.0
        %1236 = vmatprep.subr.mxu0 0.0
        %1237 = vmatpush1.msra.mxu0 0.0
        %1238 = vmatprep.subr.mxu0 0.0
        %1239 = vmatpush1.msra.mxu0 0.0
        %1240 = vmatprep.subr.mxu0 0.0
        %1241 = vmatpush1.msra.mxu0 0.0
        %1242 = vmatprep.subr.mxu0 0.0
        %1243 = vmatpush1.msra.mxu0 0.0
        %1244 = vmatprep.subr.mxu0 0.0
        %1245 = vmatpush1.msra.mxu0 0.0
        %1246 = vmatprep.subr.mxu0 0.0
        %1247 = vmatpush1.msra.mxu0 0.0
        %1248 = vmatprep.subr.mxu0 0.0
        %1249 = vmatpush1.msra.mxu0 0.0
        %1250 = vmatprep.subr.mxu0 0.0
        %1251 = vmatpush1.msra.mxu0 0.0
        %1252 = vmatprep.subr.mxu0 0.0
        %1253 = vmatpush1.msra.mxu0 0.0
        %1254 = vmatprep.subr.mxu0 0.0
        %1255 = vmatpush1.msra.mxu0 0.0
        %1256 = vmatprep.subr.mxu0 0.0
        %1257 = vmatpush1.msra.mxu0 0.0
        %1258 = vmatprep.subr.mxu0 0.0
        %1259 = vmatpush1.msra.mxu0 0.0
        %1260 = vmatprep.mubr.f32.mxu0 0.0
        %1261 = vmatmul.mubr.f32.gmra.mrb[0].mxu0 %v1157
        %v1262 = vpop.f32.mrb[0].mxu0
        %v1263 = vadd.f32 %v1194, %v1262
        %v1264 = vpop.f32.mrb[0].mxu0
        %1265 = vmatprep.mubr.f32.mxu0 0.0
        %1266 = vmatmul.mubr.f32.gmra.mrb[0].mxu0 %v1158
        %v1267 = vpop.f32.mrb[0].mxu0
        %v1268 = vadd.f32 %v1194, %v1267
        %v1269 = vpop.f32.mrb[0].mxu0
        %1270 = vmatprep.mubr.f32.mxu0 0.0
        %1271 = vmatmul.mubr.f32.gmra.mrb[0].mxu0 %v1159
        %v1272 = vpop.f32.mrb[0].mxu0
        %v1273 = vadd.f32 %v1194, %v1272
        %v1274 = vpop.f32.mrb[0].mxu0
        %1275 = vmatprep.mubr.f32.mxu0 0.0
        %1276 = vmatmul.mubr.f32.gmra.mrb[0].mxu0 %v1160
        %v1277 = vpop.f32.mrb[0].mxu0
        %v1278 = vadd.f32 %v1194, %v1277
        %v1279 = vpop.f32.mrb[0].mxu0
        %1280 = vmatprep.mubr.f32.mxu0 0.0
        %1281 = vmatmul.mubr.f32.gmra.mrb[0].mxu0 %v1161
        %v1282 = vpop.f32.mrb[0].mxu0
        %v1283 = vadd.f32 %v1194, %v1282
        %v1284 = vpop.f32.mrb[0].mxu0
        %1285 = vmatprep.mubr.f32.mxu0 0.0
        %1286 = vmatmul.mubr.f32.gmra.mrb[0].mxu0 %v1162
        %v1287 = vpop.f32.mrb[0].mxu0
        %v1288 = vadd.f32 %v1194, %v1287
        %v1289 = vpop.f32.mrb[0].mxu0
        %1290 = vmatprep.mubr.f32.mxu0 0.0
        %1291 = vmatmul.mubr.f32.gmra.mrb[0].mxu0 %v1163
        %v1292 = vpop.f32.mrb[0].mxu0
        %v1293 = vadd.f32 %v1194, %v1292
        %v1294 = vpop.f32.mrb[0].mxu0
        %1295 = vmatprep.mubr.f32.mxu0 0.0
        %1296 = vmatmul.mubr.f32.gmra.mrb[0].mxu0 %v1164
        %v1297 = vpop.f32.mrb[0].mxu0
        %v1298 = vadd.f32 %v1194, %v1297
        %v1299 = vpop.f32.mrb[0].mxu0
        %1300 = vmatprep.mubr.f32.mxu0 0.0
        %1301 = vmatmul.mubr.f32.gmra.mrb[0].mxu0 %v1165
        %v1302 = vpop.f32.mrb[0].mxu0
        %v1303 = vadd.f32 %v1194, %v1302
        %v1304 = vpop.f32.mrb[0].mxu0
        %1305 = vmatprep.mubr.f32.mxu0 0.0
        %1306 = vmatmul.mubr.f32.gmra.mrb[0].mxu0 %v1166
        %v1307 = vpop.f32.mrb[0].mxu0
        %v1308 = vadd.f32 %v1194, %v1307
        %v1309 = vpop.f32.mrb[0].mxu0
        %1310 = vmatprep.mubr.f32.mxu0 0.0
        %1311 = vmatmul.mubr.f32.gmra.mrb[0].mxu0 %v1167
        %v1312 = vpop.f32.mrb[0].mxu0
        %v1313 = vadd.f32 %v1194, %v1312
        %v1314 = vpop.f32.mrb[0].mxu0
        %1315 = vmatprep.mubr.f32.mxu0 0.0
        %1316 = vmatmul.mubr.f32.gmra.mrb[0].mxu0 %v1168
        %v1317 = vpop.f32.mrb[0].mxu0
        %v1318 = vadd.f32 %v1194, %v1317
        %v1319 = vpop.f32.mrb[0].mxu0
        %1320 = vmatprep.mubr.f32.mxu0 0.0
        %1321 = vmatmul.mubr.f32.gmra.mrb[0].mxu0 %v1169
        %v1322 = vpop.f32.mrb[0].mxu0
        %v1323 = vadd.f32 %v1194, %v1322
        %v1324 = vpop.f32.mrb[0].mxu0
        %1325 = vmatprep.mubr.f32.mxu0 0.0
        %1326 = vmatmul.mubr.f32.gmra.mrb[0].mxu0 %v1170
        %v1327 = vpop.f32.mrb[0].mxu0
        %v1328 = vadd.f32 %v1194, %v1327
        %v1329 = vpop.f32.mrb[0].mxu0
        %1330 = vmatprep.mubr.f32.mxu0 0.0
        %1331 = vmatmul.mubr.f32.gmra.mrb[0].mxu0 %v1171
        %v1332 = vpop.f32.mrb[0].mxu0
        %v1333 = vadd.f32 %v1194, %v1332
        %v1334 = vpop.f32.mrb[0].mxu0
        %1335 = vmatprep.mubr.f32.mxu0 0.0
        %1336 = vmatmul.mubr.f32.gmra.mrb[0].mxu0 %v1172
        %v1337 = vpop.f32.mrb[0].mxu0
        %v1338 = vadd.f32 %v1194, %v1337
        %v1339 = vpop.f32.mrb[0].mxu0
        %1340 = vdwg.mxu0
        %v1341 = vtanh.pop %v1263
        %v1342 = vtanh.pop %v1268
        %v1343 = vtanh.pop %v1273
        %v1344 = vtanh.pop %v1278
        %v1345 = vtanh.pop %v1283
        %v1346 = vtanh.pop %v1288
        %v1347 = vtanh.pop %v1293
        %v1348 = vtanh.pop %v1298
        %v1349 = vtanh.pop %v1303
        %v1350 = vtanh.pop %v1308
        %v1351 = vtanh.pop %v1313
        %v1352 = vtanh.pop %v1318
        %v1353 = vtanh.pop %v1323
        %v1354 = vtanh.pop %v1328
        %v1355 = vtanh.pop %v1333
        %v1356 = vtanh.pop %v1338
        %v1357 = vand.u32 2147483647, %v1341
        %v1358 = vand.u32 2147483647, %v1342
        %v1359 = vand.u32 2147483647, %v1343
        %v1360 = vand.u32 2147483647, %v1344
        %v1361 = vand.u32 2147483647, %v1345
        %v1362 = vand.u32 2147483647, %v1346
        %v1363 = vand.u32 2147483647, %v1347
        %v1364 = vand.u32 2147483647, %v1348
        %v1365 = vand.u32 2147483647, %v1349
        %v1366 = vand.u32 2147483647, %v1350
        %v1367 = vand.u32 2147483647, %v1351
        %v1368 = vand.u32 2147483647, %v1352
        %v1369 = vand.u32 2147483647, %v1353
        %v1370 = vand.u32 2147483647, %v1354
        %v1371 = vand.u32 2147483647, %v1355
        %v1372 = vand.u32 2147483647, %v1356
        %1373 = vst [vmem:[%s272] sm:$0xff] %v1357
        %1374 = vst [vmem:[%s272 + $0x8] sm:$0xff] %v1358
        %1375 = vst [vmem:[%s272 + $0x10] sm:$0xff] %v1359
        %1376 = vst [vmem:[%s272 + $0x18] sm:$0xff] %v1360
        %1377 = vst [vmem:[%s272 + $0x20] sm:$0xff] %v1361
        %1378 = vst [vmem:[%s272 + $0x28] sm:$0xff] %v1362
        %1379 = vst [vmem:[%s272 + $0x30] sm:$0xff] %v1363
        %1380 = vst [vmem:[%s272 + $0x38] sm:$0xff] %v1364
        %1381 = vst [vmem:[%s272 + $0x40] sm:$0xff] %v1365
        %1382 = vst [vmem:[%s272 + $0x48] sm:$0xff] %v1366
        %1383 = vst [vmem:[%s272 + $0x50] sm:$0xff] %v1367
        %1384 = vst [vmem:[%s272 + $0x58] sm:$0xff] %v1368
        %1385 = vst [vmem:[%s272 + $0x60] sm:$0xff] %v1369
        %1386 = vst [vmem:[%s272 + $0x68] sm:$0xff] %v1370
        %1387 = vst [vmem:[%s272 + $0x70] sm:$0xff] %v1371
        %1388 = vst [vmem:[%s272 + $0x78] sm:$0xff] %v1372
        %s1389 = sand.u32 %s181, 1
        %s1390 = scalar_lea.sflag [#allocation3], %s1389
        %s1391 = sand.u32 %s181, 1
        %s1392 = smul.addr %s1391, 128
        %s1393 = scalar_lea.vmem [#allocation2], %s1392
        // Predicated region
        $region49: #{tpu_custom_call.1} parent=47 // pred_check
          %p1394 = pneg %p191
        $region50: #{tpu_custom_call.1} parent=47 // pred_check_branch
          %1396 = sbr.rel (%p1394) target = $region52
        $region51: #{tpu_custom_call.1} parent=47 // pred_region
          %s1397 = smul.u32 16, %s21
          %s1399 = ssub.s32 2048, 2048
          %1400 = vsyncadd %s1390, %s1399
          %s1401 = smul.addr %s1397, 128
          %s1402 = scalar_lea.hbm %s7, %s1401
          %s1403 = sshll.u32 %s1393, 4
          %s1404 = int_to_ptr.vmem [resolvable:$true] %s1403
          %1409 = dma.vmem_to_hbm [thread:$0]  %s1404, 2048, %s1402, %s1390, 128, 128, 8
        $region52: #{tpu_custom_call.1} parent=47 // pred_fallthru
          _
      $region48: #{tpu_custom_call.1} parent=5 // pred_fallthru
        _
      %p1410 = scmp.le.s32.totalorder 2, %s16
      // Predicated region
      $region53: #{tpu_custom_call.1} parent=5 // pred_check
        %p1411 = pneg %p1410
      $region54: #{tpu_custom_call.1} parent=5 // pred_check_branch
        %1413 = sbr.rel (%p1411) target = $region56
      $region55: #{tpu_custom_call.1} parent=5 // pred_region
        %s1414 = ssub.s32 %s16, 2
        // Predicated region
        $region57: #{tpu_custom_call.1} parent=55 // pred_check
          %p1415 = pneg %p197
        $region58: #{tpu_custom_call.1} parent=55 // pred_check_branch
          %1417 = sbr.rel (%p1415) target = $region60
        $region59: #{tpu_custom_call.1} parent=55 // pred_region
          %s1418 = sand.u32 %s182, 1
          %s1419 = scalar_lea.sflag [#allocation3], %s1418
          %s1420 = sand.u32 %s182, 1
          %s1421 = smul.addr %s1420, 128
          %s1422 = scalar_lea.vmem [#allocation2], %s1421
          %1423 = dma.done %s1419, 2048
        $region60: #{tpu_custom_call.1} parent=55 // pred_fallthru
          _
      $region56: #{tpu_custom_call.1} parent=5 // pred_fallthru
        _
    $region6: #{tpu_custom_call.1} parent=1 // loop_footer
      %s20 = sadd.s32 1, %s16
    $region7: #{tpu_custom_call.1} parent=1 // loop_footer_branch
      %15 = sbr.rel target = $region3
    $region8: #{tpu_custom_call.1} parent=1 // loop_exit
      _
    %1424 = vsyncpa [#allocation3], 1
    %s1425 = scalar_lea.sflag [#allocation3], 1
    %1426 = vsyncpa %s1425, 1

</llo_original>
